<compile_context>
chip_gen: v7x
topology: tpu7x:2x2x1
jax: 0.10.0
libtpu: 0.0.40
codegen_flags: <defaults>
</compile_context>

<pallas_src>
import functools

import jax
import jax.numpy as jnp
from jax.experimental import pallas as pl
from jax.experimental.pallas import tpu as pltpu


# ----------------------------------------------------------------------------
# Init-time glue (plain JAX).  These reproduce ConstructAdjMatrix.forward() and
# FusionFeature.forward(), which the model's __init__ runs once to build constants.
# TODO(synk): verify torch_z_normalized axis convention against MOFGCN/myutils.py.
# ----------------------------------------------------------------------------
def exp_similarity(x, sigma, normalize=True):
    x = x.astype(jnp.float32)
    if normalize:
        mean = jnp.mean(x, axis=0, keepdims=True)
        std = jnp.std(x, axis=0, keepdims=True, ddof=1)
        x = (x - mean) / (std + 1e-8)
    sq = jnp.sum(x * x, axis=1, keepdims=True)
    d2 = jnp.maximum(sq + sq.T - 2.0 * (x @ x.T), 0.0)
    dist = jnp.sqrt(d2)
    return jnp.exp(-dist / (2.0 * sigma ** 2))


def full_kernel_mat(sim):
    n = sim.shape[0]
    eye = jnp.eye(n, dtype=jnp.float32)
    off = sim * (1.0 - eye)
    p = off / (2.0 * jnp.sum(off, axis=1, keepdims=True))
    return p + 0.5 * eye


def sparse_kernel_mat(sim, k):
    kth = jnp.sort(sim, axis=1)[:, -k][:, None]
    masked = jnp.where(sim >= kth, sim, 0.0)
    return masked / jnp.sum(masked, axis=1, keepdims=True)


def jaccard_coef(feat):
    feat = feat.astype(jnp.float32)
    inter = feat @ feat.T
    rs = jnp.sum(feat, axis=1)
    union = rs[:, None] + rs[None, :] - inter
    return inter / jnp.maximum(union, 1e-8)


def construct_adj_matrix_hat(adj):
    """ConstructAdjMatrix.forward(): I + D^-1/2 [[I, A],[A^T, I]] D^-1/2."""
    n_cell, n_drug = adj.shape
    top = jnp.concatenate([jnp.eye(n_cell, dtype=jnp.float32), adj], axis=1)
    bot = jnp.concatenate([adj.T, jnp.eye(n_drug, dtype=jnp.float32)], axis=1)
    a = jnp.concatenate([top, bot], axis=0)
    d = jnp.power(jnp.sum(a, axis=1), -0.5)
    a_norm = d[:, None] * a * d[None, :]
    return jnp.eye(a.shape[0], dtype=jnp.float32) + a_norm


def fusion_feature(gene, cna, mutation, sigma, k, iterates, feature_drug):
    """FusionFeature.forward(): SNF fusion of cell omics + drug Jaccard, block-diag."""
    gene_sim = exp_similarity(gene, sigma, normalize=True)
    cna_sim = exp_similarity(cna, sigma, normalize=False)
    mut_sim = exp_similarity(mutation, sigma, normalize=False)
    drug_sim = jaccard_coef(feature_drug)

    gene_p, gene_s = full_kernel_mat(gene_sim), sparse_kernel_mat(gene_sim, k)
    cna_p, cna_s = full_kernel_mat(cna_sim), sparse_kernel_mat(cna_sim, k)
    mut_p, mut_s = full_kernel_mat(mut_sim), sparse_kernel_mat(mut_sim, k)
    for _ in range(iterates):
        gene_p_next = gene_s @ ((cna_p + mut_p) / 2.0) @ gene_s.T
        cna_p_next = cna_s @ ((gene_p + mut_p) / 2.0) @ cna_s.T
        mut_p_next = mut_s @ ((cna_p + gene_p) / 2.0) @ mut_s.T
        gene_p, cna_p, mut_p = gene_p_next, cna_p_next, mut_p_next
    cell_sim = ((gene_p + cna_p + mut_p) / 3.0).astype(jnp.float32)

    drug_full = full_kernel_mat(drug_sim)
    n_cell, n_drug = cell_sim.shape[0], drug_full.shape[0]
    top = jnp.concatenate(
        [cell_sim, jnp.zeros((n_cell, n_drug), jnp.float32)], axis=1)
    bot = jnp.concatenate(
        [jnp.zeros((n_drug, n_cell), jnp.float32), drug_full], axis=1)
    return jnp.concatenate([top, bot], axis=0)


# ----------------------------------------------------------------------------
# Small helpers
# ----------------------------------------------------------------------------
def _round_up(x, m):
    return ((x + m - 1) // m) * m


def _pad2(x, rows, cols, dtype):
    buf = jnp.zeros((rows, cols), dtype)
    return buf.at[:x.shape[0], :x.shape[1]].set(x.astype(dtype))


@functools.lru_cache(maxsize=1)
def _vmem_limit_bytes():
    """Generation-dependent VMEM cap: ~112 MiB on 128-MiB parts, ~56 MiB on v7x."""
    try:
        cap = int(pltpu.get_tpu_info().vmem_capacity_bytes)
    except Exception:
        cap = 64 * 1024 * 1024
    return int(min(cap - (8 << 20), (cap * 7) // 8))


def _probe_kernel(x_ref, o_ref):
    o_ref[...] = x_ref[...] + 1.0


@functools.lru_cache(maxsize=1)
def _single_buffer_ok():
    """Probe once (eagerly, outside any jit trace) whether pipeline_mode=pl.Buffered(1)
    is supported for constant-index inputs on this Pallas build."""
    try:
        spec = pl.BlockSpec((8, 128), lambda i: (0, 0), pipeline_mode=pl.Buffered(1))
        fn = pl.pallas_call(
            _probe_kernel,
            out_shape=jax.ShapeDtypeStruct((16, 128), jnp.float32),
            grid=(2,),
            in_specs=[spec],
            out_specs=pl.BlockSpec((8, 128), lambda i: (i, 0)))
        jax.block_until_ready(fn(jnp.zeros((8, 128), jnp.float32)))
        return True
    except Exception:
        return False


def _const_spec(block_shape, index_map):
    """BlockSpec for a grid-invariant operand: single-buffered when supported."""
    if _single_buffer_ok():
        return pl.BlockSpec(block_shape, index_map, pipeline_mode=pl.Buffered(1))
    return pl.BlockSpec(block_shape, index_map)


# ----------------------------------------------------------------------------
# Pallas kernels
# ----------------------------------------------------------------------------
def _fw_kernel(f_ref, w1_ref, fw_ref):
    """fw_tile = F_tile @ W1  (bf16 out, f32 accumulation)."""
    fw = jnp.dot(f_ref[...], w1_ref[...], preferred_element_type=jnp.float32)
    fw_ref[...] = fw.astype(jnp.bfloat16)


def _encoder_rows_kernel(a_ref, fw_ref, h_ref):
    """GEncoder rows: h_tile = relu(A_tile @ fw)   (reassociated A @ (F @ W1))."""
    h_ref[...] = jnp.maximum(
        jnp.dot(a_ref[...], fw_ref[...], preferred_element_type=jnp.float32), 0.0)


def _drug_prep_kernel(n_hid2, h2_pad, eps, a_drug_ref, fw_ref, wd_ref, dn_ref):
    """One-shot drug half: dn = unit-norm(mean-centered(relu(A_drug@fw) @ Wd)) in bf16."""
    h_drug = jnp.maximum(
        jnp.dot(a_drug_ref[...], fw_ref[...], preferred_element_type=jnp.float32), 0.0)
    drug = jnp.dot(h_drug.astype(jnp.bfloat16), wd_ref[...],
                   preferred_element_type=jnp.float32)
    inv_h2 = 1.0 / float(n_hid2)
    dc = drug - jnp.sum(drug, axis=1, keepdims=True) * inv_h2
    if n_hid2 != h2_pad:   # padded wd columns are exact zeros; mask only fixes centering
        col_mask = (jax.lax.broadcasted_iota(jnp.int32, (1, h2_pad), 1)
                    < n_hid2).astype(jnp.float32)
        dc = dc * col_mask
    lyy = jnp.sum(dc * dc, axis=1, keepdims=True)
    dn_ref[...] = (dc * jax.lax.rsqrt(lyy + eps)).astype(jnp.bfloat16)


def _cell_tile_kernel(n_hid2, h2_pad, alpha, eps,
                      a_cell_ref, fw_ref, wc_ref, dn_ref, out_ref):
    """Per cell-row tile: encoder rows + cell decoder + Pearson corr vs dn + sigmoid."""
    h_cell = jnp.maximum(
        jnp.dot(a_cell_ref[...], fw_ref[...], preferred_element_type=jnp.float32), 0.0)
    cell = jnp.dot(h_cell.astype(jnp.bfloat16), wc_ref[...],
                   preferred_element_type=jnp.float32)
    inv_h2 = 1.0 / float(n_hid2)
    cc = cell - jnp.sum(cell, axis=1, keepdims=True) * inv_h2
    if n_hid2 != h2_pad:
        col_mask = (jax.lax.broadcasted_iota(jnp.int32, (1, h2_pad), 1)
                    < n_hid2).astype(jnp.float32)
        cc = cc * col_mask
    lxx = jnp.sum(cc * cc, axis=1, keepdims=True)
    # bf16 MXU matmul contracting the last dims directly (no transpose of dn).
    num = jax.lax.dot_general(cc.astype(jnp.bfloat16), dn_ref[...],
                              (((1,), (1,)), ((), ())),
                              preferred_element_type=jnp.float32)
    corr = num * jax.lax.rsqrt(lxx + eps)
    out_ref[...] = jax.nn.sigmoid(alpha * corr)


# ----------------------------------------------------------------------------
# pallas_call wrappers
# ----------------------------------------------------------------------------
def _compute_fw(f_pad, w1_pad, *, row_tile=512):
    """fw = F @ W1, row-tiled over F with a parallel grid."""
    n_pad, nf_pad = f_pad.shape
    h1_pad = w1_pad.shape[1]
    tr = min(row_tile, n_pad)
    if n_pad % tr != 0:
        tr = 128                      # n_pad is always a multiple of 128
    return pl.pallas_call(
        _fw_kernel,
        out_shape=jax.ShapeDtypeStruct((n_pad, h1_pad), jnp.bfloat16),
        grid=(n_pad // tr,),
        in_specs=[pl.BlockSpec((tr, nf_pad), lambda i: (i, 0)),
                  _const_spec((nf_pad, h1_pad), lambda i: (0, 0))],
        out_specs=pl.BlockSpec((tr, h1_pad), lambda i: (i, 0)),
        compiler_params=pltpu.CompilerParams(
            dimension_semantics=("parallel",),
            vmem_limit_bytes=_vmem_limit_bytes()),
        cost_estimate=pl.CostEstimate(
            flops=int(2 * n_pad * nf_pad * h1_pad), transcendentals=0,
            bytes_accessed=int(2 * (n_pad * nf_pad + nf_pad * h1_pad + n_pad * h1_pad))),
    )(f_pad, w1_pad)


def _drug_prep(a_drug, fw, wd_pad, *, n_hid2, eps):
    nd_pad, n_pad = a_drug.shape
    h1_pad = fw.shape[1]
    h2_pad = wd_pad.shape[1]
    kernel = functools.partial(_drug_prep_kernel, n_hid2, h2_pad, float(eps))
    flops = 2 * (nd_pad * n_pad * h1_pad + nd_pad * h1_pad * h2_pad)
    bytes_acc = 2 * (nd_pad * n_pad + n_pad * h1_pad + h1_pad * h2_pad + nd_pad * h2_pad)
    return pl.pallas_call(
        kernel,
        out_shape=jax.ShapeDtypeStruct((nd_pad, h2_pad), jnp.bfloat16),
        grid=(1,),
        in_specs=[_const_spec((nd_pad, n_pad), lambda i: (0, 0)),
                  _const_spec((n_pad, h1_pad), lambda i: (0, 0)),
                  _const_spec((h1_pad, h2_pad), lambda i: (0, 0))],
        out_specs=pl.BlockSpec((nd_pad, h2_pad), lambda i: (0, 0)),
        compiler_params=pltpu.CompilerParams(
            dimension_semantics=("arbitrary",),
            vmem_limit_bytes=_vmem_limit_bytes()),
        cost_estimate=pl.CostEstimate(flops=int(flops), transcendentals=int(nd_pad),
                                      bytes_accessed=int(bytes_acc)),
    )(a_drug, fw, wd_pad)


def _cell_scores(a_cell, fw, wc_pad, dn, *, tm, n_hid2, alpha, eps):
    nc_pad, n_pad = a_cell.shape
    h1_pad = fw.shape[1]
    h2_pad = wc_pad.shape[1]
    nd_pad = dn.shape[0]
    kernel = functools.partial(_cell_tile_kernel, n_hid2, h2_pad,
                               float(alpha), float(eps))
    flops = 2 * (nc_pad * n_pad * h1_pad + nc_pad * h1_pad * h2_pad
                 + nc_pad * h2_pad * nd_pad)
    bytes_acc = (2 * (nc_pad * n_pad + n_pad * h1_pad + h1_pad * h2_pad + nd_pad * h2_pad)
                 + 4 * nc_pad * nd_pad)
    return pl.pallas_call(
        kernel,
        out_shape=jax.ShapeDtypeStruct((nc_pad, nd_pad), jnp.float32),
        grid=(nc_pad // tm,),
        in_specs=[pl.BlockSpec((tm, n_pad), lambda i: (i, 0)),
                  _const_spec((n_pad, h1_pad), lambda i: (0, 0)),
                  _const_spec((h1_pad, h2_pad), lambda i: (0, 0)),
                  _const_spec((nd_pad, h2_pad), lambda i: (0, 0))],
        out_specs=pl.BlockSpec((tm, nd_pad), lambda i: (i, 0)),
        compiler_params=pltpu.CompilerParams(
            dimension_semantics=("parallel",),
            vmem_limit_bytes=_vmem_limit_bytes()),
        cost_estimate=pl.CostEstimate(flops=int(flops),
                                      transcendentals=int(nc_pad * nd_pad + nc_pad),
                                      bytes_accessed=int(bytes_acc)),
    )(a_cell, fw, wc_pad, dn)


# ----------------------------------------------------------------------------
# Public wrappers
# ----------------------------------------------------------------------------
def pad_gmodel_operands(adj_hat, feature, w1_t, wc_t, wd_t, n_cell, n_drug,
                        tile_m=512):
    """Zero-pad + bf16-cast all constants ONCE (hoisted out of the forward path).
    Padded weight columns are exact zeros, which the 1/n_hid2 Pearson mean relies on."""
    n_feat = feature.shape[1]
    h1 = w1_t.shape[1]
    h2 = wc_t.shape[1]

    n_pad = _round_up(adj_hat.shape[1], 128)     # node axis (K of A @ fw)
    nf_pad = _round_up(n_feat, 128)
    h1_pad = _round_up(h1, 128)
    h2_pad = _round_up(h2, 128)
    nd_pad = _round_up(n_drug, 128)              # lane-dense output axis
    tm = max(16, min(_round_up(tile_m, 16), _round_up(n_cell, 16)))  # bf16 tile = (16,128)
    nc_pad = _round_up(n_cell, tm)

    bf16 = jnp.bfloat16
    a_cell = _pad2(adj_hat[:n_cell, :], nc_pad, n_pad, bf16)
    a_drug = _pad2(adj_hat[n_cell:n_cell + n_drug, :], nd_pad, n_pad, bf16)
    f_pad = _pad2(feature, n_pad, nf_pad, bf16)
    w1_pad = _pad2(w1_t, nf_pad, h1_pad, bf16)
    wc_pad = _pad2(wc_t, h1_pad, h2_pad, bf16)
    wd_pad = _pad2(wd_t, h1_pad, h2_pad, bf16)

    dims = dict(n_pad=n_pad, nf_pad=nf_pad, h1_pad=h1_pad, h2_pad=h2_pad,
                nd_pad=nd_pad, nc_pad=nc_pad, tm=tm)
    return (a_cell, a_drug, f_pad, w1_pad, wc_pad, wd_pad), dims


def _gmodel_forward_padded(a_cell, a_drug, f_pad, w1_pad, wc_pad, wd_pad,
                           *, dims, n_hid2, n_cell, n_drug, alpha, eps):
    fw = _compute_fw(f_pad, w1_pad)
    dn = _drug_prep(a_drug, fw, wd_pad, n_hid2=n_hid2, eps=eps)
    out_pad = _cell_scores(a_cell, fw, wc_pad, dn, tm=dims["tm"],
                           n_hid2=n_hid2, alpha=alpha, eps=eps)
    # Padded cell/drug rows produce corr=0 -> 0.5; slice them away here.
    return out_pad[:n_cell, :n_drug]


def make_gmodel_forward(dims, *, n_hid2, n_cell, n_drug, alpha, eps=1e-12):
    _single_buffer_ok()   # resolve Buffered(1) support eagerly, outside the jit trace
    fn = functools.partial(_gmodel_forward_padded, dims=dims, n_hid2=n_hid2,
                           n_cell=n_cell, n_drug=n_drug, alpha=float(alpha),
                           eps=float(eps))
    return jax.jit(fn)


def gmodel_forward(adj_hat, feature, w1_t, wc_t, wd_t, n_cell, n_drug, alpha,
                   *, tile_m=512, eps=1e-12):
    """Convenience one-shot wrapper (pads every call; prefer make_gmodel_forward)."""
    padded, dims = pad_gmodel_operands(adj_hat, feature, w1_t, wc_t, wd_t,
                                       n_cell, n_drug, tile_m)
    fwd = make_gmodel_forward(dims, n_hid2=wc_t.shape[1], n_cell=n_cell,
                              n_drug=n_drug, alpha=alpha, eps=eps)
    return fwd(*padded)


def gencoder_forward(adj_hat, feature, w1_t, *, row_tile=512):
    """GEncoder.forward(): relu((adj_mat @ feature) @ W1), reassociated as A @ (F@W1)."""
    _single_buffer_ok()
    n_rows = adj_hat.shape[0]
    n_hid1 = w1_t.shape[1]
    k_pad = _round_up(adj_hat.shape[1], 128)
    nf_pad = _round_up(feature.shape[1], 128)
    h1_pad = _round_up(n_hid1, 128)
    tr = max(16, min(_round_up(row_tile, 16), _round_up(n_rows, 16)))
    r_pad = _round_up(n_rows, tr)

    bf16 = jnp.bfloat16
    a_pad = _pad2(adj_hat, r_pad, k_pad, bf16)
    f_pad = _pad2(feature, k_pad, nf_pad, bf16)
    w1_pad = _pad2(w1_t, nf_pad, h1_pad, bf16)

    fw = _compute_fw(f_pad, w1_pad)
    h = pl.pallas_call(
        _encoder_rows_kernel,
        out_shape=jax.ShapeDtypeStruct((r_pad, h1_pad), jnp.float32),
        grid=(r_pad // tr,),
        in_specs=[pl.BlockSpec((tr, k_pad), lambda i: (i, 0)),
                  _const_spec((k_pad, h1_pad), lambda i: (0, 0))],
        out_specs=pl.BlockSpec((tr, h1_pad), lambda i: (i, 0)),
        compiler_params=pltpu.CompilerParams(
            dimension_semantics=("parallel",),
            vmem_limit_bytes=_vmem_limit_bytes()),
        cost_estimate=pl.CostEstimate(
            flops=int(2 * r_pad * k_pad * h1_pad), transcendentals=0,
            bytes_accessed=int(2 * (r_pad * k_pad + k_pad * h1_pad) + 4 * r_pad * h1_pad)),
    )(a_pad, fw)
    return h[:n_rows, :n_hid1]


# ----------------------------------------------------------------------------
# References (correctness checks only)
# ----------------------------------------------------------------------------
def gmodel_forward_matched_ref(padded, n_hid2, n_cell, n_drug, alpha, eps=1e-12):
    """Pure-JAX reference with the SAME padded bf16/f32 numerics as the kernels."""
    a_cell, a_drug, f_pad, w1_pad, wc_pad, wd_pad = padded
    f32, bf16 = jnp.float32, jnp.bfloat16
    h2_pad = wc_pad.shape[1]
    mask = (jnp.arange(h2_pad)[None, :] < n_hid2).astype(f32)

    fw = jnp.dot(f_pad, w1_pad, preferred_element_type=f32).astype(bf16)
    h_d = jnp.maximum(jnp.dot(a_drug, fw, preferred_element_type=f32), 0.0)
    drug = jnp.dot(h_d.astype(bf16), wd_pad, preferred_element_type=f32)
    dc = (drug - jnp.sum(drug, axis=1, keepdims=True) / n_hid2) * mask
    lyy = jnp.sum(dc * dc, axis=1, keepdims=True)
    dn = (dc * jax.lax.rsqrt(lyy + eps)).astype(bf16)

    h_c = jnp.maximum(jnp.dot(a_cell, fw, preferred_element_type=f32), 0.0)
    cell = jnp.dot(h_c.astype(bf16), wc_pad, preferred_element_type=f32)
    cc = (cell - jnp.sum(cell, axis=1, keepdims=True) / n_hid2) * mask
    lxx = jnp.sum(cc * cc, axis=1, keepdims=True)
    num = jax.lax.dot_general(cc.astype(bf16), dn, (((1,), (1,)), ((), ())),
                              preferred_element_type=f32)
    corr = num * jax.lax.rsqrt(lxx + eps)
    return jax.nn.sigmoid(alpha * corr)[:n_cell, :n_drug]


def gmodel_forward_f32_ref(adj_hat, feature, w1_t, wc_t, wd_t, n_cell, n_drug, alpha):
    """Plain f32, un-padded reference of the original torch forward."""
    h = jnp.maximum((adj_hat @ feature) @ w1_t, 0.0)
    cell = h[:n_cell] @ wc_t
    drug = h[n_cell:n_cell + n_drug] @ wd_t
    cc = cell - jnp.mean(cell, axis=1, keepdims=True)
    dc = drug - jnp.mean(drug, axis=1, keepdims=True)
    corr = (cc @ dc.T) / jnp.sqrt(
        jnp.sum(cc * cc, axis=1, keepdims=True)
        * jnp.sum(dc * dc, axis=1, keepdims=True).T)
    return jax.nn.sigmoid(alpha * corr)


def gencoder_matched_ref(adj_hat, feature, w1_t):
    f32, bf16 = jnp.float32, jnp.bfloat16
    fw = jnp.dot(feature.astype(bf16), w1_t.astype(bf16),
                 preferred_element_type=f32).astype(bf16)
    return jnp.maximum(jnp.dot(adj_hat.astype(bf16), fw,
                               preferred_element_type=f32), 0.0)


def gencoder_f32_ref(adj_hat, feature, w1_t):
    return jnp.maximum((adj_hat @ feature) @ w1_t, 0.0)


# ----------------------------------------------------------------------------
# Demo / self-check
# ----------------------------------------------------------------------------
if __name__ == "__main__":
    # Small deterministic problem sizes.
    n_cell, n_drug = 40, 12
    n_gene, n_cna, n_mut, n_dfeat = 24, 20, 20, 16
    n_hid1, n_hid2 = 32, 16
    sigma, k, iterates, alpha = 2.0, 3, 2, 5.74

    key = jax.random.PRNGKey(0)
    ks = jax.random.split(key, 8)
    adj = (jax.random.uniform(ks[0], (n_cell, n_drug)) < 0.3).astype(jnp.float32)
    gene = jax.random.normal(ks[1], (n_cell, n_gene), jnp.float32)
    cna = jax.random.normal(ks[2], (n_cell, n_cna), jnp.float32)
    mutation = (jax.random.uniform(ks[3], (n_cell, n_mut)) < 0.2).astype(jnp.float32)
    feature_drug = (jax.random.uniform(ks[4], (n_drug, n_dfeat)) < 0.5).astype(jnp.float32)

    n_nodes = n_cell + n_drug
    # nn.Linear(in, out, bias=False) weights, stored pre-transposed as (in, out).
    w1_t = jax.random.normal(ks[5], (n_nodes, n_hid1), jnp.float32) / jnp.sqrt(n_nodes)
    wc_t = jax.random.normal(ks[6], (n_hid1, n_hid2), jnp.float32) / jnp.sqrt(n_hid1)
    wd_t = jax.random.normal(ks[7], (n_hid1, n_hid2), jnp.float32) / jnp.sqrt(n_hid1)

    # __init__-time constants (plain JAX glue).
    adj_hat = construct_adj_matrix_hat(adj)
    feature = fusion_feature(gene, cna, mutation, sigma, k, iterates, feature_drug)

    # Pad once (hoisted out of the forward path), then run the jitted padded forward.
    # tile_m=16 exercises a 3-step parallel cell-row grid at demo size; production
    # default is 512 per the performance review.
    padded, dims = pad_gmodel_operands(adj_hat, feature, w1_t, wc_t, wd_t,
                                       n_cell, n_drug, tile_m=16)
    fwd = make_gmodel_forward(dims, n_hid2=n_hid2, n_cell=n_cell,
                              n_drug=n_drug, alpha=alpha)
    out = jax.block_until_ready(fwd(*padded))

    # Stand-alone GEncoder output (the spec'd module), row-tiled.
    h_enc = jax.block_until_ready(gencoder_forward(adj_hat, feature, w1_t, row_tile=32))

    # ---- checks ----
    ref_matched = gmodel_forward_matched_ref(padded, n_hid2, n_cell, n_drug, alpha)
    ref_f32 = gmodel_forward_f32_ref(adj_hat, feature, w1_t, wc_t, wd_t,
                                     n_cell, n_drug, alpha)
    enc_matched = gencoder_matched_ref(adj_hat, feature, w1_t)
    enc_f32 = gencoder_f32_ref(adj_hat, feature, w1_t)

    assert out.shape == (n_cell, n_drug) and out.dtype == jnp.float32
    assert bool(jnp.all(jnp.isfinite(out))), "non-finite values in kernel output"
    assert jnp.allclose(out, ref_matched, rtol=1e-2, atol=1e-2), \
        "mismatch vs bf16-matched JAX reference"
    assert jnp.allclose(out, ref_f32, rtol=1e-1, atol=1e-1), \
        "mismatch vs f32 JAX reference (sanity bound)"

    assert h_enc.shape == (n_nodes, n_hid1) and h_enc.dtype == jnp.float32
    assert bool(jnp.all(jnp.isfinite(h_enc))), "non-finite values in GEncoder output"
    assert jnp.allclose(h_enc, enc_matched, rtol=2e-2, atol=2e-2), \
        "GEncoder mismatch vs bf16-matched reference"
    assert jnp.allclose(h_enc, enc_f32, rtol=1e-1, atol=1e-1), \
        "GEncoder mismatch vs f32 reference (sanity bound)"

    print("KERNEL_OK")
</pallas_src>

<mosaic_0001>
module attributes {stable_mosaic.version = 11 : i64} {
  func.func @_probe_kernel(%arg0: i32, %arg1: memref<8x128xf32, #tpu.memory_space<vmem>>, %arg2: memref<8x128xf32, #tpu.memory_space<vmem>>) attributes {dimension_semantics = [#tpu.dimension_semantics<arbitrary>], iteration_bounds = array<i64: 2>, scalar_prefetch = 0 : i64, scratch_operands = 0 : i64, tpu.core_type = #tpu.core_type<tc>, window_params = [{pipeline_mode = #tpu.pipeline_mode<synchronous>, transform_indices = @transform_0, window_bounds = array<i64: 8, 128>}, {transform_indices = @transform_1, window_bounds = array<i64: 8, 128>}]} {
    %c0 = arith.constant 0 : index
    %c0_0 = arith.constant 0 : index
    %0 = vector.load %arg1[%c0, %c0_0] : memref<8x128xf32, #tpu.memory_space<vmem>>, vector<8x128xf32>
    %cst = arith.constant 1.000000e+00 : f32
    %1 = vector.broadcast %cst : f32 to vector<8x128xf32>
    %2 = arith.addf %0, %1 : vector<8x128xf32>
    %c0_1 = arith.constant 0 : index
    %c0_2 = arith.constant 0 : index
    %3 = vector.load %arg2[%c0_1, %c0_2] : memref<8x128xf32, #tpu.memory_space<vmem>>, vector<8x128xf32>
    tpu.vector_store %arg2[%c0_1, %c0_2], %2 {strides = array<i32>} : memref<8x128xf32, #tpu.memory_space<vmem>>, vector<8x128xf32>,
    return
  }
  func.func @transform_0(%arg0: i32) -> (i32, i32) {
    %c0_i32 = arith.constant 0 : i32
    %c0_i32_0 = arith.constant 0 : i32
    %c0_i32_1 = arith.constant 0 : i32
    return %c0_i32, %c0_i32_0 : i32, i32
  }
  func.func @transform_1(%arg0: i32) -> (i32, i32) {
    %c0_i32 = arith.constant 0 : i32
    %c0_i32_0 = arith.constant 0 : i32
    return %arg0, %c0_i32 : i32, i32
  }
}

module attributes {stable_mosaic.version = 11 : i64} {
  func.func @_cell_tile_kernel(%arg0: i32, %arg1: memref<16x128xbf16, #tpu.memory_space<vmem>>, %arg2: memref<128x128xbf16, #tpu.memory_space<vmem>>, %arg3: memref<128x128xbf16, #tpu.memory_space<vmem>>, %arg4: memref<128x128xbf16, #tpu.memory_space<vmem>>, %arg5: memref<16x128xf32, #tpu.memory_space<vmem>>) attributes {dimension_semantics = [#tpu.dimension_semantics<parallel>], iteration_bounds = array<i64: 3>, scalar_prefetch = 0 : i64, scratch_operands = 0 : i64, tpu.core_type = #tpu.core_type<tc>, window_params = [{transform_indices = @transform_0, window_bounds = array<i64: 16, 128>}, {pipeline_mode = #tpu.pipeline_mode<synchronous>, transform_indices = @transform_1, window_bounds = array<i64: 128, 128>}, {pipeline_mode = #tpu.pipeline_mode<synchronous>, transform_indices = @transform_2, window_bounds = array<i64: 128, 128>}, {pipeline_mode = #tpu.pipeline_mode<synchronous>, transform_indices = @transform_3, window_bounds = array<i64: 128, 128>}, {transform_indices = @transform_4, window_bounds = array<i64: 16, 128>}]} {
    %c0 = arith.constant 0 : index
    %c0_0 = arith.constant 0 : index
    %0 = vector.load %arg1[%c0, %c0_0] : memref<16x128xbf16, #tpu.memory_space<vmem>>, vector<16x128xbf16>
    %c0_1 = arith.constant 0 : index
    %c0_2 = arith.constant 0 : index
    %1 = vector.load %arg2[%c0_1, %c0_2] : memref<128x128xbf16, #tpu.memory_space<vmem>>, vector<128x128xbf16>
    %cst = arith.constant dense<0.000000e+00> : vector<16x128xf32>
    %2 = tpu.matmul %0, %1, %cst {dimension_numbers = #tpu.dot_dimension_numbers<[1], [0], [0], [1], [0, 0, 1, 1], [], []>} : vector<16x128xbf16>, vector<128x128xbf16>, vector<16x128xf32> -> vector<16x128xf32>
    %cst_3 = arith.constant 0.000000e+00 : f32
    %3 = vector.broadcast %cst_3 : f32 to vector<16x128xf32>
    %4 = arith.maximumf %2, %3 : vector<16x128xf32>
    %5 = arith.truncf %4 : vector<16x128xf32> to vector<16x128xbf16>
    %c0_4 = arith.constant 0 : index
    %c0_5 = arith.constant 0 : index
    %6 = vector.load %arg3[%c0_4, %c0_5] : memref<128x128xbf16, #tpu.memory_space<vmem>>, vector<128x128xbf16>
    %cst_6 = arith.constant dense<0.000000e+00> : vector<16x128xf32>
    %7 = tpu.matmul %5, %6, %cst_6 {dimension_numbers = #tpu.dot_dimension_numbers<[1], [0], [0], [1], [0, 0, 1, 1], [], []>} : vector<16x128xbf16>, vector<128x128xbf16>, vector<16x128xf32> -> vector<16x128xf32>
    %cst_7 = arith.constant dense<0.000000e+00> : vector<16xf32>
    %8 = vector.multi_reduction <add>, %7, %cst_7 [1] : vector<16x128xf32> to vector<16xf32>
    %9 = vector.shape_cast %8 : vector<16xf32> to vector<16x1xf32>
    %cst_8 = arith.constant 6.250000e-02 : f32
    %10 = vector.broadcast %cst_8 : f32 to vector<16x1xf32>
    %11 = arith.mulf %9, %10 : vector<16x1xf32>
    %12 = vector.broadcast %11 : vector<16x1xf32> to vector<16x128xf32>
    %13 = arith.subf %7, %12 : vector<16x128xf32>
    %14 = tpu.iota {dimensions = array<i32: 1>} : vector<1x128xi32>
    %c16_i32 = arith.constant 16 : i32
    %15 = vector.broadcast %c16_i32 : i32 to vector<1x128xi32>
    %16 = arith.cmpi slt, %14, %15 : vector<1x128xi32>
    %17 = arith.extui %16 : vector<1x128xi1> to vector<1x128xi32>
    %18 = arith.sitofp %17 : vector<1x128xi32> to vector<1x128xf32>
    %19 = vector.broadcast %18 : vector<1x128xf32> to vector<16x128xf32>
    %20 = arith.mulf %13, %19 : vector<16x128xf32>
    %21 = arith.mulf %20, %20 : vector<16x128xf32>
    %cst_9 = arith.constant dense<0.000000e+00> : vector<16xf32>
    %22 = vector.multi_reduction <add>, %21, %cst_9 [1] : vector<16x128xf32> to vector<16xf32>
    %23 = vector.shape_cast %22 : vector<16xf32> to vector<16x1xf32>
    %24 = arith.truncf %20 : vector<16x128xf32> to vector<16x128xbf16>
    %c0_10 = arith.constant 0 : index
    %c0_11 = arith.constant 0 : index
    %25 = vector.load %arg4[%c0_10, %c0_11] : memref<128x128xbf16, #tpu.memory_space<vmem>>, vector<128x128xbf16>
    %cst_12 = arith.constant dense<0.000000e+00> : vector<16x128xf32>
    %26 = tpu.matmul %24, %25, %cst_12 {dimension_numbers = #tpu.dot_dimension_numbers<[1], [1], [0], [0], [0, 0, 1, 0], [], []>} : vector<16x128xbf16>, vector<128x128xbf16>, vector<16x128xf32> -> vector<16x128xf32>
    %cst_13 = arith.constant 9.99999996E-13 : f32
    %27 = vector.broadcast %cst_13 : f32 to vector<16x1xf32>
    %28 = arith.addf %23, %27 : vector<16x1xf32>
    %29 = math.rsqrt %28 : vector<16x1xf32>
    %30 = vector.broadcast %29 : vector<16x1xf32> to vector<16x128xf32>
    %31 = arith.mulf %26, %30 : vector<16x128xf32>
    %cst_14 = arith.constant 5.740000e+00 : f32
    %32 = vector.broadcast %cst_14 : f32 to vector<16x128xf32>
    %33 = arith.mulf %32, %31 : vector<16x128xf32>
    %34 = arith.negf %33 : vector<16x128xf32>
    %35 = math.exp %34 : vector<16x128xf32>
    %cst_15 = arith.constant 1.000000e+00 : f32
    %36 = vector.broadcast %cst_15 : f32 to vector<16x128xf32>
    %37 = arith.addf %36, %35 : vector<16x128xf32>
    %38 = arith.divf %36, %37 : vector<16x128xf32>
    %c0_16 = arith.constant 0 : index
    %c0_17 = arith.constant 0 : index
    %39 = vector.load %arg5[%c0_16, %c0_17] : memref<16x128xf32, #tpu.memory_space<vmem>>, vector<16x128xf32>
    tpu.vector_store %arg5[%c0_16, %c0_17], %38 {strides = array<i32>} : memref<16x128xf32, #tpu.memory_space<vmem>>, vector<16x128xf32>,
    return
  }
  func.func @transform_0(%arg0: i32) -> (i32, i32) {
    %c0_i32 = arith.constant 0 : i32
    %c0_i32_0 = arith.constant 0 : i32
    return %arg0, %c0_i32 : i32, i32
  }
  func.func @transform_1(%arg0: i32) -> (i32, i32) {
    %c0_i32 = arith.constant 0 : i32
    %c0_i32_0 = arith.constant 0 : i32
    %c0_i32_1 = arith.constant 0 : i32
    return %c0_i32, %c0_i32_0 : i32, i32
  }
  func.func @transform_2(%arg0: i32) -> (i32, i32) {
    %c0_i32 = arith.constant 0 : i32
    %c0_i32_0 = arith.constant 0 : i32
    %c0_i32_1 = arith.constant 0 : i32
    return %c0_i32, %c0_i32_0 : i32, i32
  }
  func.func @transform_3(%arg0: i32) -> (i32, i32) {
    %c0_i32 = arith.constant 0 : i32
    %c0_i32_0 = arith.constant 0 : i32
    %c0_i32_1 = arith.constant 0 : i32
    return %c0_i32, %c0_i32_0 : i32, i32
  }
  func.func @transform_4(%arg0: i32) -> (i32, i32) {
    %c0_i32 = arith.constant 0 : i32
    %c0_i32_0 = arith.constant 0 : i32
    return %arg0, %c0_i32 : i32, i32
  }
}

module attributes {stable_mosaic.version = 11 : i64} {
  func.func @_drug_prep_kernel(%arg0: i32, %arg1: memref<128x128xbf16, #tpu.memory_space<vmem>>, %arg2: memref<128x128xbf16, #tpu.memory_space<vmem>>, %arg3: memref<128x128xbf16, #tpu.memory_space<vmem>>, %arg4: memref<128x128xbf16, #tpu.memory_space<vmem>>) attributes {dimension_semantics = [#tpu.dimension_semantics<arbitrary>], iteration_bounds = array<i64: 1>, scalar_prefetch = 0 : i64, scratch_operands = 0 : i64, tpu.core_type = #tpu.core_type<tc>, window_params = [{pipeline_mode = #tpu.pipeline_mode<synchronous>, transform_indices = @transform_0, window_bounds = array<i64: 128, 128>}, {pipeline_mode = #tpu.pipeline_mode<synchronous>, transform_indices = @transform_1, window_bounds = array<i64: 128, 128>}, {pipeline_mode = #tpu.pipeline_mode<synchronous>, transform_indices = @transform_2, window_bounds = array<i64: 128, 128>}, {pipeline_mode = #tpu.pipeline_mode<synchronous>, transform_indices = @transform_3, window_bounds = array<i64: 128, 128>}]} {
    %c0 = arith.constant 0 : index
    %c0_0 = arith.constant 0 : index
    %0 = vector.load %arg1[%c0, %c0_0] : memref<128x128xbf16, #tpu.memory_space<vmem>>, vector<128x128xbf16>
    %c0_1 = arith.constant 0 : index
    %c0_2 = arith.constant 0 : index
    %1 = vector.load %arg2[%c0_1, %c0_2] : memref<128x128xbf16, #tpu.memory_space<vmem>>, vector<128x128xbf16>
    %cst = arith.constant dense<0.000000e+00> : vector<128x128xf32>
    %2 = tpu.matmul %0, %1, %cst {dimension_numbers = #tpu.dot_dimension_numbers<[1], [0], [0], [1], [0, 0, 1, 1], [], []>} : vector<128x128xbf16>, vector<128x128xbf16>, vector<128x128xf32> -> vector<128x128xf32>
    %cst_3 = arith.constant 0.000000e+00 : f32
    %3 = vector.broadcast %cst_3 : f32 to vector<128x128xf32>
    %4 = arith.maximumf %2, %3 : vector<128x128xf32>
    %5 = arith.truncf %4 : vector<128x128xf32> to vector<128x128xbf16>
    %c0_4 = arith.constant 0 : index
    %c0_5 = arith.constant 0 : index
    %6 = vector.load %arg3[%c0_4, %c0_5] : memref<128x128xbf16, #tpu.memory_space<vmem>>, vector<128x128xbf16>
    %cst_6 = arith.constant dense<0.000000e+00> : vector<128x128xf32>
    %7 = tpu.matmul %5, %6, %cst_6 {dimension_numbers = #tpu.dot_dimension_numbers<[1], [0], [0], [1], [0, 0, 1, 1], [], []>} : vector<128x128xbf16>, vector<128x128xbf16>, vector<128x128xf32> -> vector<128x128xf32>
    %cst_7 = arith.constant dense<0.000000e+00> : vector<128xf32>
    %8 = vector.multi_reduction <add>, %7, %cst_7 [1] : vector<128x128xf32> to vector<128xf32>
    %9 = vector.shape_cast %8 : vector<128xf32> to vector<128x1xf32>
    %cst_8 = arith.constant 6.250000e-02 : f32
    %10 = vector.broadcast %cst_8 : f32 to vector<128x1xf32>
    %11 = arith.mulf %9, %10 : vector<128x1xf32>
    %12 = vector.broadcast %11 : vector<128x1xf32> to vector<128x128xf32>
    %13 = arith.subf %7, %12 : vector<128x128xf32>
    %14 = tpu.iota {dimensions = array<i32: 1>} : vector<1x128xi32>
    %c16_i32 = arith.constant 16 : i32
    %15 = vector.broadcast %c16_i32 : i32 to vector<1x128xi32>
    %16 = arith.cmpi slt, %14, %15 : vector<1x128xi32>
    %17 = arith.extui %16 : vector<1x128xi1> to vector<1x128xi32>
    %18 = arith.sitofp %17 : vector<1x128xi32> to vector<1x128xf32>
    %19 = vector.broadcast %18 : vector<1x128xf32> to vector<128x128xf32>
    %20 = arith.mulf %13, %19 : vector<128x128xf32>
    %21 = arith.mulf %20, %20 : vector<128x128xf32>
    %cst_9 = arith.constant dense<0.000000e+00> : vector<128xf32>
    %22 = vector.multi_reduction <add>, %21, %cst_9 [1] : vector<128x128xf32> to vector<128xf32>
    %23 = vector.shape_cast %22 : vector<128xf32> to vector<128x1xf32>
    %cst_10 = arith.constant 9.99999996E-13 : f32
    %24 = vector.broadcast %cst_10 : f32 to vector<128x1xf32>
    %25 = arith.addf %23, %24 : vector<128x1xf32>
    %26 = math.rsqrt %25 : vector<128x1xf32>
    %27 = vector.broadcast %26 : vector<128x1xf32> to vector<128x128xf32>
    %28 = arith.mulf %20, %27 : vector<128x128xf32>
    %29 = arith.truncf %28 : vector<128x128xf32> to vector<128x128xbf16>
    %c0_11 = arith.constant 0 : index
    %c0_12 = arith.constant 0 : index
    %30 = vector.load %arg4[%c0_11, %c0_12] : memref<128x128xbf16, #tpu.memory_space<vmem>>, vector<128x128xbf16>
    tpu.vector_store %arg4[%c0_11, %c0_12], %29 {strides = array<i32>} : memref<128x128xbf16, #tpu.memory_space<vmem>>, vector<128x128xbf16>,
    return
  }
  func.func @transform_0(%arg0: i32) -> (i32, i32) {
    %c0_i32 = arith.constant 0 : i32
    %c0_i32_0 = arith.constant 0 : i32
    %c0_i32_1 = arith.constant 0 : i32
    return %c0_i32, %c0_i32_0 : i32, i32
  }
  func.func @transform_1(%arg0: i32) -> (i32, i32) {
    %c0_i32 = arith.constant 0 : i32
    %c0_i32_0 = arith.constant 0 : i32
    %c0_i32_1 = arith.constant 0 : i32
    return %c0_i32, %c0_i32_0 : i32, i32
  }
  func.func @transform_2(%arg0: i32) -> (i32, i32) {
    %c0_i32 = arith.constant 0 : i32
    %c0_i32_0 = arith.constant 0 : i32
    %c0_i32_1 = arith.constant 0 : i32
    return %c0_i32, %c0_i32_0 : i32, i32
  }
  func.func @transform_3(%arg0: i32) -> (i32, i32) {
    %c0_i32 = arith.constant 0 : i32
    %c0_i32_0 = arith.constant 0 : i32
    %c0_i32_1 = arith.constant 0 : i32
    return %c0_i32, %c0_i32_0 : i32, i32
  }
}

module attributes {stable_mosaic.version = 11 : i64} {
  func.func @_fw_kernel(%arg0: i32, %arg1: memref<128x128xbf16, #tpu.memory_space<vmem>>, %arg2: memref<128x128xbf16, #tpu.memory_space<vmem>>, %arg3: memref<128x128xbf16, #tpu.memory_space<vmem>>) attributes {dimension_semantics = [#tpu.dimension_semantics<parallel>], iteration_bounds = array<i64: 1>, scalar_prefetch = 0 : i64, scratch_operands = 0 : i64, tpu.core_type = #tpu.core_type<tc>, window_params = [{transform_indices = @transform_0, window_bounds = array<i64: 128, 128>}, {pipeline_mode = #tpu.pipeline_mode<synchronous>, transform_indices = @transform_1, window_bounds = array<i64: 128, 128>}, {transform_indices = @transform_2, window_bounds = array<i64: 128, 128>}]} {
    %c0 = arith.constant 0 : index
    %c0_0 = arith.constant 0 : index
    %0 = vector.load %arg1[%c0, %c0_0] : memref<128x128xbf16, #tpu.memory_space<vmem>>, vector<128x128xbf16>
    %c0_1 = arith.constant 0 : index
    %c0_2 = arith.constant 0 : index
    %1 = vector.load %arg2[%c0_1, %c0_2] : memref<128x128xbf16, #tpu.memory_space<vmem>>, vector<128x128xbf16>
    %cst = arith.constant dense<0.000000e+00> : vector<128x128xf32>
    %2 = tpu.matmul %0, %1, %cst {dimension_numbers = #tpu.dot_dimension_numbers<[1], [0], [0], [1], [0, 0, 1, 1], [], []>} : vector<128x128xbf16>, vector<128x128xbf16>, vector<128x128xf32> -> vector<128x128xf32>
    %3 = arith.truncf %2 : vector<128x128xf32> to vector<128x128xbf16>
    %c0_3 = arith.constant 0 : index
    %c0_4 = arith.constant 0 : index
    %4 = vector.load %arg3[%c0_3, %c0_4] : memref<128x128xbf16, #tpu.memory_space<vmem>>, vector<128x128xbf16>
    tpu.vector_store %arg3[%c0_3, %c0_4], %3 {strides = array<i32>} : memref<128x128xbf16, #tpu.memory_space<vmem>>, vector<128x128xbf16>,
    return
  }
  func.func @transform_0(%arg0: i32) -> (i32, i32) {
    %c0_i32 = arith.constant 0 : i32
    %c0_i32_0 = arith.constant 0 : i32
    return %arg0, %c0_i32 : i32, i32
  }
  func.func @transform_1(%arg0: i32) -> (i32, i32) {
    %c0_i32 = arith.constant 0 : i32
    %c0_i32_0 = arith.constant 0 : i32
    %c0_i32_1 = arith.constant 0 : i32
    return %c0_i32, %c0_i32_0 : i32, i32
  }
  func.func @transform_2(%arg0: i32) -> (i32, i32) {
    %c0_i32 = arith.constant 0 : i32
    %c0_i32_0 = arith.constant 0 : i32
    return %arg0, %c0_i32 : i32, i32
  }
}

</mosaic_0001>

<llo_original>
// kernel: tpu_custom_call.1
$region0: #{tpu_custom_call.1}
  #allocation0 [shape = 'u32[]', space=smem, size = 0x4, offset = 0x4, fixed_abs, tag = 'smem constant byte address 0x4 - core index']
  #allocation1 [shape = 'u32[144,128]{1,0:T(1,128)}', space=vmem, size = 0x12000, scoped, tag = 'internal scratch']
  %s0 = inlined_call_operand.hbm [shape: f32[8,128], index: 0, kind: input, shape index: {}]
  %s1 = inlined_call_operand.hbm [shape: f32[16,128], index: 1, kind: output, shape index: {}]
  %s2 = sld [smem:[#allocation0]]
  $region41: #{tpu_custom_call.1} parent=0
    _
  %s4 = ssub.s32 1, %s2
  %s5 = scalar_select 0, %s4, %s2
  $region1: #{tpu_custom_call.1} parent=0
    #allocation2 [shape = 'u8[4096]{0}', space=vmem, size = 0x1000, scoped, tag = 'input window, operand 0, single buffered']
    #allocation3 [shape = 's32[2]{0}', space=sflag, size = 0x8, scoped, tag = 'scoped memory for tpu_custom_call.1']
    #allocation4 [shape = 's32[2]{0}', space=sflag, size = 0x8, scoped, tag = 'scoped memory for tpu_custom_call.1']
    #allocation5 [shape = 'u8[8192]{0}', space=vmem, size = 0x2000, scoped, tag = 'output window, operand 0']
    %6 = vsyncpa [#allocation3], 0
    %7 = vsyncpa [#allocation4], 0
    %s8 = scalar_lea.sflag [#allocation4], 1
    %9 = vsyncpa %s8, 0
    loop: start=0, step=1, limit=4
    $region2: #{tpu_custom_call.1} parent=1 // loop_pre_header
      _
    $region3: #{tpu_custom_call.1} parent=1 // loop_header
      %s11 = sphi 0, %s15
      %p12 = scmp.ge.s32.totalorder %s11, 4
      %s19 = sphi 0, %s19
      %s21 = sphi 0, %s19
      %s22 = sphi 0, %s21
      %s36 = sphi 0, %s22
      %s42 = sphi 0, %s44
      %s45 = sphi 0, %s42
      %s46 = sphi 0, %s45
      %s62 = sphi 0, %s46
    $region4: #{tpu_custom_call.1} parent=1 // loop_header_branch
      %14 = sbr.rel (%p12) target = $region8
    $region5: #{tpu_custom_call.1} parent=1 // loop_body
      %s16 = ssub.s32 %s11, 1
      %s17 = ssub.s32 %s11, 2
      %s18 = sadd.s32 %s11, 1
      %s20 = sadd.s32 %s19, 1
      %p23 = scmp.eq.s32.totalorder %s11, 1
      %p24 = scmp.ne.s32.totalorder %s19, %s21
      %p25 = scmp.eq.s32.totalorder %s11, 0
      %p26 = por %p24, %p25
      %p27 = scmp.ne.s32.totalorder %s19, %s21
      %p28 = scmp.eq.s32.totalorder %s16, 1
      %p29 = por %p27, %p28
      %p30 = scmp.ne.s32.totalorder %s21, %s22
      %p31 = scmp.eq.s32.totalorder %s16, 0
      %p32 = por %p30, %p31
      %p33 = scmp.ne.s32.totalorder %s21, %s22
      %p34 = scmp.eq.s32.totalorder %s17, 1
      %p35 = por %p33, %p34
      %p37 = scmp.ne.s32.totalorder %s22, %s36
      %p38 = scmp.eq.s32.totalorder %s17, 0
      %p39 = por %p37, %p38
      %s40 = ssub.s32 %s11, %s18
      %p41 = scmp.eq.s32.totalorder %s40, 0
      %s43 = sadd.s32 %s42, 1
      %s44 = scalar_select %p41, %s42, %s43
      %p47 = pneg %p41
      %p48 = scmp.eq.s32.totalorder %s11, 1
      %p49 = por %p47, %p48
      %p50 = scmp.ne.s32.totalorder %s42, %s45
      %p51 = scmp.eq.s32.totalorder %s11, 0
      %p52 = por %p50, %p51
      %p53 = scmp.ne.s32.totalorder %s42, %s45
      %p54 = scmp.eq.s32.totalorder %s16, 1
      %p55 = por %p53, %p54
      %p56 = scmp.ne.s32.totalorder %s45, %s46
      %p57 = scmp.eq.s32.totalorder %s16, 0
      %p58 = por %p56, %p57
      %p59 = scmp.ne.s32.totalorder %s45, %s46
      %p60 = scmp.eq.s32.totalorder %s17, 1
      %p61 = por %p59, %p60
      %p63 = scmp.ne.s32.totalorder %s46, %s62
      %p64 = scmp.eq.s32.totalorder %s17, 0
      %p65 = por %p63, %p64
      %p66 = scmp.le.s32.totalorder 1, %s11
      %p67 = scmp.lt.s32.totalorder %s11, 3
      %p68 = pnand %p66, %p67
      %p69 = pneg %p68
      // Predicated region
      $region9: #{tpu_custom_call.1} parent=5 // pred_check
        _
      $region10: #{tpu_custom_call.1} parent=5 // pred_check_branch
        %71 = sbr.rel (%p68) target = $region12
      $region11: #{tpu_custom_call.1} parent=5 // pred_region
        %s72 = ssub.s32 %s11, 1
        // Predicated region
        $region13: #{tpu_custom_call.1} parent=11 // pred_check
          %p73 = pneg %p32
        $region14: #{tpu_custom_call.1} parent=11 // pred_check_branch
          %75 = sbr.rel (%p73) target = $region16
        $region15: #{tpu_custom_call.1} parent=11 // pred_region
          %s77 = ssub.s32 128, 128
          %78 = vsyncadd [#allocation3], %s77
          %s80 = sshll.u32 [#allocation2], 4
          %s81 = int_to_ptr.vmem [resolvable:$true] %s80
          %83 = dma.hbm_to_vmem [thread:$0]  %s0, 128, %s81, [#allocation3]
        $region16: #{tpu_custom_call.1} parent=11 // pred_fallthru
          _
      $region12: #{tpu_custom_call.1} parent=5 // pred_fallthru
        _
      %p84 = scmp.lt.s32.totalorder %s11, 2
      // Predicated region
      $region17: #{tpu_custom_call.1} parent=5 // pred_check
        %p85 = pneg %p84
      $region18: #{tpu_custom_call.1} parent=5 // pred_check_branch
        %87 = sbr.rel (%p85) target = $region20
      $region19: #{tpu_custom_call.1} parent=5 // pred_region
        _
      $region20: #{tpu_custom_call.1} parent=5 // pred_fallthru
        _
      %p88 = scmp.le.s32.totalorder 1, %s11
      %p89 = scmp.lt.s32.totalorder %s11, 3
      %p90 = pnand %p88, %p89
      %p91 = pneg %p90
      // Predicated region
      $region21: #{tpu_custom_call.1} parent=5 // pred_check
        _
      $region22: #{tpu_custom_call.1} parent=5 // pred_check_branch
        %93 = sbr.rel (%p90) target = $region24
      $region23: #{tpu_custom_call.1} parent=5 // pred_region
        %s94 = ssub.s32 %s11, 1
        // Predicated region
        $region25: #{tpu_custom_call.1} parent=23 // pred_check
          %p95 = pneg %p32
        $region26: #{tpu_custom_call.1} parent=23 // pred_check_branch
          %97 = sbr.rel (%p95) target = $region28
        $region27: #{tpu_custom_call.1} parent=23 // pred_region
          %98 = dma.done [#allocation3], 128
        $region28: #{tpu_custom_call.1} parent=23 // pred_fallthru
          _
        %p99 = pneg %p32
        %p100 = pneg %p29
        %p101 = pneg %p58
        %p102 = pneg %p55
        %s103 = sand.u32 %s45, 1
        %s104 = scalar_lea.sflag [#allocation4], %s103
        %s105 = sand.u32 %s45, 1
        %s106 = smul.addr %s105, 8
        %s107 = scalar_lea.vmem [#allocation5], %s106
        %v108 = vld [vmem:[#allocation2] sm:$0xff]
        %v109 = vadd.f32 %v108, 1.0
        %110 = vst [vmem:[%s107] sm:$0xff] %v109
        %s111 = sand.u32 %s45, 1
        %s112 = scalar_lea.sflag [#allocation4], %s111
        %s113 = sand.u32 %s45, 1
        %s114 = smul.addr %s113, 8
        %s115 = scalar_lea.vmem [#allocation5], %s114
        // Predicated region
        $region29: #{tpu_custom_call.1} parent=23 // pred_check
          %p116 = pneg %p55
        $region30: #{tpu_custom_call.1} parent=23 // pred_check_branch
          %118 = sbr.rel (%p116) target = $region32
        $region31: #{tpu_custom_call.1} parent=23 // pred_region
          %s120 = ssub.s32 128, 128
          %121 = vsyncadd %s112, %s120
          %s122 = smul.addr %s16, 128
          %s123 = scalar_lea.hbm %s1, %s122
          %s125 = sshll.u32 %s115, 4
          %s126 = int_to_ptr.vmem [resolvable:$true] %s125
          %128 = dma.vmem_to_hbm [thread:$0]  %s126, 128, %s123, %s112
        $region32: #{tpu_custom_call.1} parent=23 // pred_fallthru
          _
      $region24: #{tpu_custom_call.1} parent=5 // pred_fallthru
        _
      %p129 = scmp.le.s32.totalorder 2, %s11
      // Predicated region
      $region33: #{tpu_custom_call.1} parent=5 // pred_check
        %p130 = pneg %p129
      $region34: #{tpu_custom_call.1} parent=5 // pred_check_branch
        %132 = sbr.rel (%p130) target = $region36
      $region35: #{tpu_custom_call.1} parent=5 // pred_region
        %s133 = ssub.s32 %s11, 2
        // Predicated region
        $region37: #{tpu_custom_call.1} parent=35 // pred_check
          %p134 = pneg %p61
        $region38: #{tpu_custom_call.1} parent=35 // pred_check_branch
          %136 = sbr.rel (%p134) target = $region40
        $region39: #{tpu_custom_call.1} parent=35 // pred_region
          %s137 = sand.u32 %s46, 1
          %s138 = scalar_lea.sflag [#allocation4], %s137
          %s139 = sand.u32 %s46, 1
          %s140 = smul.addr %s139, 8
          %s141 = scalar_lea.vmem [#allocation5], %s140
          %142 = dma.done %s138, 128
        $region40: #{tpu_custom_call.1} parent=35 // pred_fallthru
          _
      $region36: #{tpu_custom_call.1} parent=5 // pred_fallthru
        _
    $region6: #{tpu_custom_call.1} parent=1 // loop_footer
      %s15 = sadd.s32 1, %s11
    $region7: #{tpu_custom_call.1} parent=1 // loop_footer_branch
      %10 = sbr.rel target = $region3
    $region8: #{tpu_custom_call.1} parent=1 // loop_exit
      _
    %143 = vsyncpa [#allocation3], 1
    %s144 = scalar_lea.sflag [#allocation3], 1
    %145 = vsyncpa %s144, 1
    %146 = vsyncpa [#allocation4], 1
    %s147 = scalar_lea.sflag [#allocation4], 1
    %148 = vsyncpa %s147, 1

// kernel: _gmodel_forward_padded.3
$region0: #{_gmodel_forward_padded.3}
  #allocation0 [shape = 'u32[]', space=smem, size = 0x4, offset = 0x4, fixed_abs, tag = 'smem constant byte address 0x4 - core index']
  #allocation1 [shape = 'u32[144,128]{1,0:T(1,128)}', space=vmem, size = 0x12000, scoped, tag = 'internal scratch']
  %s0 = inlined_call_operand.hbm [shape: bf16[128,128], index: 0, kind: input, shape index: {}]
  %s1 = inlined_call_operand.hbm [shape: bf16[128,128], index: 1, kind: input, shape index: {}]
  %s2 = inlined_call_operand.vmem [shape: bf16[128,128], index: 2, kind: output, shape index: {}]
  %s3 = sld [smem:[#allocation0]]
  $region26: #{_gmodel_forward_padded.3} parent=0
    _
  %s5 = ssub.s32 1, %s3
  %s6 = scalar_select 0, %s5, %s3
  $region1: #{_gmodel_forward_padded.3} parent=0
    #allocation2 [shape = 'u8[32768]{0}', space=vmem, size = 0x8000, scoped, tag = 'input window, operand 0, single buffered']
    #allocation3 [shape = 's32[1]{0}', space=sflag, size = 0x4, scoped, tag = 'scoped memory for _gmodel_forward_padded.3']
    #allocation4 [shape = 'u8[32768]{0}', space=vmem, size = 0x8000, scoped, tag = 'input window, operand 1, single buffered']
    #allocation5 [shape = 's32[1]{0}', space=sflag, size = 0x4, scoped, tag = 'scoped memory for _gmodel_forward_padded.3']
    %7 = vsyncpa [#allocation3], 0
    %8 = vsyncpa [#allocation5], 0
    // Predicated region
    $region2: #{_gmodel_forward_padded.3} parent=1 // pred_check
      _
    $region3: #{_gmodel_forward_padded.3} parent=1 // pred_check_branch
      %10 = sbr.rel (0) target = $region5
    $region4: #{_gmodel_forward_padded.3} parent=1 // pred_region
      %s12 = ssub.s32 1024, 1024
      %13 = vsyncadd [#allocation3], %s12
      %s14 = sshll.u32 [#allocation2], 4
      %s15 = int_to_ptr.vmem [resolvable:$true] %s14
      %20 = dma.hbm_to_vmem [thread:$0]  %s0, 1024, %s15, [#allocation3], 64, 64, 4
    $region5: #{_gmodel_forward_padded.3} parent=1 // pred_fallthru
      _
    // Predicated region
    $region6: #{_gmodel_forward_padded.3} parent=1 // pred_check
      _
    $region7: #{_gmodel_forward_padded.3} parent=1 // pred_check_branch
      %22 = sbr.rel (0) target = $region9
    $region8: #{_gmodel_forward_padded.3} parent=1 // pred_region
      %s24 = ssub.s32 1024, 1024
      %25 = vsyncadd [#allocation5], %s24
      %s26 = sshll.u32 [#allocation4], 4
      %s27 = int_to_ptr.vmem [resolvable:$true] %s26
      %32 = dma.hbm_to_vmem [thread:$0]  %s1, 1024, %s27, [#allocation5], 64, 64, 4
    $region9: #{_gmodel_forward_padded.3} parent=1 // pred_fallthru
      _
    // Predicated region
    $region10: #{_gmodel_forward_padded.3} parent=1 // pred_check
      _
    $region11: #{_gmodel_forward_padded.3} parent=1 // pred_check_branch
      %34 = sbr.rel (0) target = $region13
    $region12: #{_gmodel_forward_padded.3} parent=1 // pred_region
      %35 = dma.done [#allocation3], 1024
    $region13: #{_gmodel_forward_padded.3} parent=1 // pred_fallthru
      _
    // Predicated region
    $region14: #{_gmodel_forward_padded.3} parent=1 // pred_check
      _
    $region15: #{_gmodel_forward_padded.3} parent=1 // pred_check_branch
      %37 = sbr.rel (0) target = $region17
    $region16: #{_gmodel_forward_padded.3} parent=1 // pred_region
      %38 = dma.done [#allocation5], 1024
    $region17: #{_gmodel_forward_padded.3} parent=1 // pred_fallthru
      _
    %v40 = vld [vmem:[#allocation2] sm:$0xf]
    %v41 = vld [vmem:[#allocation2 + $0x4] sm:$0xf]
    %v42 = vld [vmem:[#allocation2 + $0x8] sm:$0xf]
    %v43 = vld [vmem:[#allocation2 + $0xc] sm:$0xf]
    %v44 = vld [vmem:[#allocation2 + $0x10] sm:$0xf]
    %v45 = vld [vmem:[#allocation2 + $0x14] sm:$0xf]
    %v46 = vld [vmem:[#allocation2 + $0x18] sm:$0xf]
    %v47 = vld [vmem:[#allocation2 + $0x1c] sm:$0xf]
    %v48 = vld [vmem:[#allocation2 + $0x20] sm:$0xf]
    %v49 = vld [vmem:[#allocation2 + $0x24] sm:$0xf]
    %v50 = vld [vmem:[#allocation2 + $0x28] sm:$0xf]
    %v51 = vld [vmem:[#allocation2 + $0x2c] sm:$0xf]
    %v52 = vld [vmem:[#allocation2 + $0x30] sm:$0xf]
    %v53 = vld [vmem:[#allocation2 + $0x34] sm:$0xf]
    %v54 = vld [vmem:[#allocation2 + $0x38] sm:$0xf]
    %v55 = vld [vmem:[#allocation2 + $0x3c] sm:$0xf]
    %v56 = vld [vmem:[#allocation4] sm:$0xf]
    %v57 = vld [vmem:[#allocation4 + $0x4] sm:$0xf]
    %v58 = vld [vmem:[#allocation4 + $0x8] sm:$0xf]
    %v59 = vld [vmem:[#allocation4 + $0xc] sm:$0xf]
    %v60 = vld [vmem:[#allocation4 + $0x10] sm:$0xf]
    %v61 = vld [vmem:[#allocation4 + $0x14] sm:$0xf]
    %v62 = vld [vmem:[#allocation4 + $0x18] sm:$0xf]
    %v63 = vld [vmem:[#allocation4 + $0x1c] sm:$0xf]
    %v64 = vld [vmem:[#allocation4 + $0x20] sm:$0xf]
    %v65 = vld [vmem:[#allocation4 + $0x24] sm:$0xf]
    %v66 = vld [vmem:[#allocation4 + $0x28] sm:$0xf]
    %v67 = vld [vmem:[#allocation4 + $0x2c] sm:$0xf]
    %v68 = vld [vmem:[#allocation4 + $0x30] sm:$0xf]
    %v69 = vld [vmem:[#allocation4 + $0x34] sm:$0xf]
    %v70 = vld [vmem:[#allocation4 + $0x38] sm:$0xf]
    %v71 = vld [vmem:[#allocation4 + $0x3c] sm:$0xf]
    %v88 = vunpack.c.l.b16 %v40
    %v89 = vunpack.c.l.b16 %v41
    %v90 = vunpack.c.l.b16 %v42
    %v91 = vunpack.c.l.b16 %v43
    %v92 = vunpack.c.l.b16 %v44
    %v93 = vunpack.c.l.b16 %v45
    %v94 = vunpack.c.l.b16 %v46
    %v95 = vunpack.c.l.b16 %v47
    %v96 = vunpack.c.l.b16 %v48
    %v97 = vunpack.c.l.b16 %v49
    %v98 = vunpack.c.l.b16 %v50
    %v99 = vunpack.c.l.b16 %v51
    %v100 = vunpack.c.l.b16 %v52
    %v101 = vunpack.c.l.b16 %v53
    %v102 = vunpack.c.l.b16 %v54
    %v103 = vunpack.c.l.b16 %v55
    %v104 = vpack.c.b16 %v89, %v88
    %v105 = vpack.c.b16 %v91, %v90
    %v106 = vpack.c.b16 %v93, %v92
    %v107 = vpack.c.b16 %v95, %v94
    %v108 = vpack.c.b16 %v97, %v96
    %v109 = vpack.c.b16 %v99, %v98
    %v110 = vpack.c.b16 %v101, %v100
    %v111 = vpack.c.b16 %v103, %v102
    %v136 = vunpack.c.l.b16 %v56
    %v137 = vunpack.c.l.b16 %v57
    %v138 = vunpack.c.l.b16 %v58
    %v139 = vunpack.c.l.b16 %v59
    %v140 = vunpack.c.l.b16 %v60
    %v141 = vunpack.c.l.b16 %v61
    %v142 = vunpack.c.l.b16 %v62
    %v143 = vunpack.c.l.b16 %v63
    %v144 = vunpack.c.l.b16 %v64
    %v145 = vunpack.c.l.b16 %v65
    %v146 = vunpack.c.l.b16 %v66
    %v147 = vunpack.c.l.b16 %v67
    %v148 = vunpack.c.l.b16 %v68
    %v149 = vunpack.c.l.b16 %v69
    %v150 = vunpack.c.l.b16 %v70
    %v151 = vunpack.c.l.b16 %v71
    %v152 = vpack.c.b16 %v137, %v136
    %v153 = vpack.c.b16 %v139, %v138
    %v154 = vpack.c.b16 %v141, %v140
    %v155 = vpack.c.b16 %v143, %v142
    %v156 = vpack.c.b16 %v145, %v144
    %v157 = vpack.c.b16 %v147, %v146
    %v158 = vpack.c.b16 %v149, %v148
    %v159 = vpack.c.b16 %v151, %v150
    %168 = vmatprep.subr.bf16.mxu0 0
    %169 = vmatpush1.bf16.msra.mxu0 %v152
    %170 = vmatprep.subr.bf16.mxu0 0
    %171 = vmatpush1.bf16.msra.mxu0 %v153
    %172 = vmatprep.subr.bf16.mxu0 0
    %173 = vmatpush1.bf16.msra.mxu0 %v154
    %174 = vmatprep.subr.bf16.mxu0 0
    %175 = vmatpush1.bf16.msra.mxu0 %v155
    %176 = vmatprep.subr.bf16.mxu0 0
    %177 = vmatpush1.bf16.msra.mxu0 %v156
    %178 = vmatprep.subr.bf16.mxu0 0
    %179 = vmatpush1.bf16.msra.mxu0 %v157
    %180 = vmatprep.subr.bf16.mxu0 0
    %181 = vmatpush1.bf16.msra.mxu0 %v158
    %182 = vmatprep.subr.bf16.mxu0 0
    %183 = vmatpush1.bf16.msra.mxu0 %v159
    %184 = vmatprep.subr.bf16.mxu0 0
    %185 = vmatpush1.bf16.msra.mxu0 0
    %186 = vmatprep.subr.bf16.mxu0 0
    %187 = vmatpush1.bf16.msra.mxu0 0
    %188 = vmatprep.subr.bf16.mxu0 0
    %189 = vmatpush1.bf16.msra.mxu0 0
    %190 = vmatprep.subr.bf16.mxu0 0
    %191 = vmatpush1.bf16.msra.mxu0 0
    %192 = vmatprep.subr.bf16.mxu0 0
    %193 = vmatpush1.bf16.msra.mxu0 0
    %194 = vmatprep.subr.bf16.mxu0 0
    %195 = vmatpush1.bf16.msra.mxu0 0
    %196 = vmatprep.subr.bf16.mxu0 0
    %197 = vmatpush1.bf16.msra.mxu0 0
    %198 = vmatprep.subr.bf16.mxu0 0
    %199 = vmatpush1.bf16.msra.mxu0 0
    %200 = vmatprep.mubr.bf16.mxu0 0
    %201 = vmatmul.mubr.bf16.gmra.mrb[0].mxu0 %v104
    %v202 = vpop.f32.mrb[0].mxu0
    %v203 = vadd.f32 0.0, %v202
    %v204 = vpop.f32.mrb[0].mxu0
    %v205 = vpop.f32.mrb[0].mxu0
    %v206 = vadd.f32 0.0, %v205
    %v207 = vpop.f32.mrb[0].mxu0
    %208 = vmatprep.mubr.bf16.mxu0 0
    %209 = vmatmul.mubr.bf16.gmra.mrb[0].mxu0 %v105
    %v210 = vpop.f32.mrb[0].mxu0
    %v211 = vadd.f32 0.0, %v210
    %v212 = vpop.f32.mrb[0].mxu0
    %v213 = vpop.f32.mrb[0].mxu0
    %v214 = vadd.f32 0.0, %v213
    %v215 = vpop.f32.mrb[0].mxu0
    %216 = vmatprep.mubr.bf16.mxu0 0
    %217 = vmatmul.mubr.bf16.gmra.mrb[0].mxu0 %v106
    %v218 = vpop.f32.mrb[0].mxu0
    %v219 = vadd.f32 0.0, %v218
    %v220 = vpop.f32.mrb[0].mxu0
    %v221 = vpop.f32.mrb[0].mxu0
    %v222 = vadd.f32 0.0, %v221
    %v223 = vpop.f32.mrb[0].mxu0
    %224 = vmatprep.mubr.bf16.mxu0 0
    %225 = vmatmul.mubr.bf16.gmra.mrb[0].mxu0 %v107
    %v226 = vpop.f32.mrb[0].mxu0
    %v227 = vadd.f32 0.0, %v226
    %v228 = vpop.f32.mrb[0].mxu0
    %v229 = vpop.f32.mrb[0].mxu0
    %v230 = vadd.f32 0.0, %v229
    %v231 = vpop.f32.mrb[0].mxu0
    %232 = vmatprep.mubr.bf16.mxu0 0
    %233 = vmatmul.mubr.bf16.gmra.mrb[0].mxu0 %v108
    %v234 = vpop.f32.mrb[0].mxu0
    %v235 = vadd.f32 0.0, %v234
    %v236 = vpop.f32.mrb[0].mxu0
    %v237 = vpop.f32.mrb[0].mxu0
    %v238 = vadd.f32 0.0, %v237
    %v239 = vpop.f32.mrb[0].mxu0
    %240 = vmatprep.mubr.bf16.mxu0 0
    %241 = vmatmul.mubr.bf16.gmra.mrb[0].mxu0 %v109
    %v242 = vpop.f32.mrb[0].mxu0
    %v243 = vadd.f32 0.0, %v242
    %v244 = vpop.f32.mrb[0].mxu0
    %v245 = vpop.f32.mrb[0].mxu0
    %v246 = vadd.f32 0.0, %v245
    %v247 = vpop.f32.mrb[0].mxu0
    %248 = vmatprep.mubr.bf16.mxu0 0
    %249 = vmatmul.mubr.bf16.gmra.mrb[0].mxu0 %v110
    %v250 = vpop.f32.mrb[0].mxu0
    %v251 = vadd.f32 0.0, %v250
    %v252 = vpop.f32.mrb[0].mxu0
    %v253 = vpop.f32.mrb[0].mxu0
    %v254 = vadd.f32 0.0, %v253
    %v255 = vpop.f32.mrb[0].mxu0
    %256 = vmatprep.mubr.bf16.mxu0 0
    %257 = vmatmul.mubr.bf16.gmra.mrb[0].mxu0 %v111
    %v258 = vpop.f32.mrb[0].mxu0
    %v259 = vadd.f32 0.0, %v258
    %v260 = vpop.f32.mrb[0].mxu0
    %v261 = vpop.f32.mrb[0].mxu0
    %v262 = vadd.f32 0.0, %v261
    %v263 = vpop.f32.mrb[0].mxu0
    %264 = vdwg.mxu0
    %v265 = vpack.c.bf16 %v206, %v203
    %v266 = vpack.c.bf16 %v214, %v211
    %v267 = vpack.c.bf16 %v222, %v219
    %v268 = vpack.c.bf16 %v230, %v227
    %v269 = vpack.c.bf16 %v238, %v235
    %v270 = vpack.c.bf16 %v246, %v243
    %v271 = vpack.c.bf16 %v254, %v251
    %v272 = vpack.c.bf16 %v262, %v259
    %v281 = vunpack.c.l.b16 %v265
    %v282 = vunpack.c.h.b16 %v265
    %v283 = vunpack.c.l.b16 %v266
    %v284 = vunpack.c.h.b16 %v266
    %v285 = vunpack.c.l.b16 %v267
    %v286 = vunpack.c.h.b16 %v267
    %v287 = vunpack.c.l.b16 %v268
    %v288 = vunpack.c.h.b16 %v268
    %v289 = vunpack.c.l.b16 %v269
    %v290 = vunpack.c.h.b16 %v269
    %v291 = vunpack.c.l.b16 %v270
    %v292 = vunpack.c.h.b16 %v270
    %v293 = vunpack.c.l.b16 %v271
    %v294 = vunpack.c.h.b16 %v271
    %v295 = vunpack.c.l.b16 %v272
    %v296 = vunpack.c.h.b16 %v272
    %v297 = vpack.c.b16 %v281, %v281
    %v298 = vpack.c.b16 %v282, %v282
    %v299 = vpack.c.b16 %v283, %v283
    %v300 = vpack.c.b16 %v284, %v284
    %v301 = vpack.c.b16 %v285, %v285
    %v302 = vpack.c.b16 %v286, %v286
    %v303 = vpack.c.b16 %v287, %v287
    %v304 = vpack.c.b16 %v288, %v288
    %v305 = vpack.c.b16 %v289, %v289
    %v306 = vpack.c.b16 %v290, %v290
    %v307 = vpack.c.b16 %v291, %v291
    %v308 = vpack.c.b16 %v292, %v292
    %v309 = vpack.c.b16 %v293, %v293
    %v310 = vpack.c.b16 %v294, %v294
    %v311 = vpack.c.b16 %v295, %v295
    %v312 = vpack.c.b16 %v296, %v296
    %329 = vst [vmem:[%s2] sm:$0xf] %v297
    %330 = vst [vmem:[%s2 + $0x4] sm:$0xf] %v298
    %331 = vst [vmem:[%s2 + $0x8] sm:$0xf] %v299
    %332 = vst [vmem:[%s2 + $0xc] sm:$0xf] %v300
    %333 = vst [vmem:[%s2 + $0x10] sm:$0xf] %v301
    %334 = vst [vmem:[%s2 + $0x14] sm:$0xf] %v302
    %335 = vst [vmem:[%s2 + $0x18] sm:$0xf] %v303
    %336 = vst [vmem:[%s2 + $0x1c] sm:$0xf] %v304
    %337 = vst [vmem:[%s2 + $0x20] sm:$0xf] %v305
    %338 = vst [vmem:[%s2 + $0x24] sm:$0xf] %v306
    %339 = vst [vmem:[%s2 + $0x28] sm:$0xf] %v307
    %340 = vst [vmem:[%s2 + $0x2c] sm:$0xf] %v308
    %341 = vst [vmem:[%s2 + $0x30] sm:$0xf] %v309
    %342 = vst [vmem:[%s2 + $0x34] sm:$0xf] %v310
    %343 = vst [vmem:[%s2 + $0x38] sm:$0xf] %v311
    %344 = vst [vmem:[%s2 + $0x3c] sm:$0xf] %v312
    // Predicated region
    $region18: #{_gmodel_forward_padded.3} parent=1 // pred_check
      _
    $region19: #{_gmodel_forward_padded.3} parent=1 // pred_check_branch
      %346 = sbr.rel (0) target = $region21
    $region20: #{_gmodel_forward_padded.3} parent=1 // pred_region
      _
    $region21: #{_gmodel_forward_padded.3} parent=1 // pred_fallthru
      _
    // Predicated region
    $region22: #{_gmodel_forward_padded.3} parent=1 // pred_check
      _
    $region23: #{_gmodel_forward_padded.3} parent=1 // pred_check_branch
      %348 = sbr.rel (0) target = $region25
    $region24: #{_gmodel_forward_padded.3} parent=1 // pred_region
      _
    $region25: #{_gmodel_forward_padded.3} parent=1 // pred_fallthru
      _
    %349 = vsyncpa [#allocation3], 1
    %350 = vsyncpa [#allocation5], 1

// kernel: _gmodel_forward_padded.5
$region0: #{_gmodel_forward_padded.5}
  #allocation0 [shape = 'u32[]', space=smem, size = 0x4, offset = 0x4, fixed_abs, tag = 'smem constant byte address 0x4 - core index']
  #allocation1 [shape = 'u32[144,128]{1,0:T(1,128)}', space=vmem, size = 0x12000, scoped, tag = 'internal scratch']
  %s0 = inlined_call_operand.vmem [shape: bf16[48,128], index: 0, kind: input, shape index: {}]
  %s1 = inlined_call_operand.vmem [shape: bf16[128,128], index: 1, kind: input, shape index: {}]
  %s2 = inlined_call_operand.vmem [shape: bf16[128,128], index: 2, kind: input, shape index: {}]
  %s3 = inlined_call_operand.vmem [shape: bf16[128,128], index: 3, kind: input, shape index: {}]
  %s4 = inlined_call_operand.vmem [shape: f32[48,128], index: 4, kind: output, shape index: {}]
  %s5 = sld [smem:[#allocation0]]
  $region49: #{_gmodel_forward_padded.5} parent=0
    _
  %s7 = ssub.s32 1, %s5
  %s8 = scalar_select 0, %s7, %s5
  loop: start=0, step=1, limit=5
  $region2: #{_gmodel_forward_padded.5} parent=0 // loop_pre_header
    _
  $region3: #{_gmodel_forward_padded.5} parent=0 // loop_header
    %s10 = sphi 0, %s14
    %p11 = scmp.ge.s32.totalorder %s10, 5
    %s20 = sphi 0, %s22
    %s23 = sphi 0, %s20
    %s24 = sphi 0, %s23
    %s40 = sphi 0, %s24
    %s44 = sphi 0, %s44
    %s46 = sphi 0, %s44
    %s47 = sphi 0, %s46
    %s61 = sphi 0, %s47
    %s65 = sphi 0, %s65
    %s67 = sphi 0, %s65
    %s68 = sphi 0, %s67
    %s82 = sphi 0, %s68
    %s86 = sphi 0, %s86
    %s88 = sphi 0, %s86
    %s89 = sphi 0, %s88
    %s103 = sphi 0, %s89
    %s109 = sphi 0, %s111
    %s112 = sphi 0, %s109
    %s113 = sphi 0, %s112
    %s129 = sphi 0, %s113
  $region4: #{_gmodel_forward_padded.5} parent=0 // loop_header_branch
    %13 = sbr.rel (%p11) target = $region8
  $region5: #{_gmodel_forward_padded.5} parent=0 // loop_body
    %s15 = ssub.s32 %s10, 1
    %s16 = ssub.s32 %s10, 2
    %s17 = sadd.s32 %s10, 1
    %s18 = ssub.s32 %s10, %s17
    %p19 = scmp.eq.s32.totalorder %s18, 0
    %s21 = sadd.s32 %s20, 1
    %s22 = scalar_select %p19, %s20, %s21
    %p25 = pneg %p19
    %p26 = scmp.eq.s32.totalorder %s10, 2
    %p27 = por %p25, %p26
    %p28 = scmp.ne.s32.totalorder %s20, %s23
    %p29 = scmp.eq.s32.totalorder %s10, 0
    %p30 = por %p28, %p29
    %p31 = scmp.ne.s32.totalorder %s20, %s23
    %p32 = scmp.eq.s32.totalorder %s15, 2
    %p33 = por %p31, %p32
    %p34 = scmp.ne.s32.totalorder %s23, %s24
    %p35 = scmp.eq.s32.totalorder %s15, 0
    %p36 = por %p34, %p35
    %p37 = scmp.ne.s32.totalorder %s23, %s24
    %p38 = scmp.eq.s32.totalorder %s16, 2
    %p39 = por %p37, %p38
    %p41 = scmp.ne.s32.totalorder %s24, %s40
    %p42 = scmp.eq.s32.totalorder %s16, 0
    %p43 = por %p41, %p42
    %s45 = sadd.s32 %s44, 1
    %p48 = scmp.eq.s32.totalorder %s10, 2
    %p49 = scmp.ne.s32.totalorder %s44, %s46
    %p50 = scmp.eq.s32.totalorder %s10, 0
    %p51 = por %p49, %p50
    %p52 = scmp.ne.s32.totalorder %s44, %s46
    %p53 = scmp.eq.s32.totalorder %s15, 2
    %p54 = por %p52, %p53
    %p55 = scmp.ne.s32.totalorder %s46, %s47
    %p56 = scmp.eq.s32.totalorder %s15, 0
    %p57 = por %p55, %p56
    %p58 = scmp.ne.s32.totalorder %s46, %s47
    %p59 = scmp.eq.s32.totalorder %s16, 2
    %p60 = por %p58, %p59
    %p62 = scmp.ne.s32.totalorder %s47, %s61
    %p63 = scmp.eq.s32.totalorder %s16, 0
    %p64 = por %p62, %p63
    %s66 = sadd.s32 %s65, 1
    %p69 = scmp.eq.s32.totalorder %s10, 2
    %p70 = scmp.ne.s32.totalorder %s65, %s67
    %p71 = scmp.eq.s32.totalorder %s10, 0
    %p72 = por %p70, %p71
    %p73 = scmp.ne.s32.totalorder %s65, %s67
    %p74 = scmp.eq.s32.totalorder %s15, 2
    %p75 = por %p73, %p74
    %p76 = scmp.ne.s32.totalorder %s67, %s68
    %p77 = scmp.eq.s32.totalorder %s15, 0
    %p78 = por %p76, %p77
    %p79 = scmp.ne.s32.totalorder %s67, %s68
    %p80 = scmp.eq.s32.totalorder %s16, 2
    %p81 = por %p79, %p80
    %p83 = scmp.ne.s32.totalorder %s68, %s82
    %p84 = scmp.eq.s32.totalorder %s16, 0
    %p85 = por %p83, %p84
    %s87 = sadd.s32 %s86, 1
    %p90 = scmp.eq.s32.totalorder %s10, 2
    %p91 = scmp.ne.s32.totalorder %s86, %s88
    %p92 = scmp.eq.s32.totalorder %s10, 0
    %p93 = por %p91, %p92
    %p94 = scmp.ne.s32.totalorder %s86, %s88
    %p95 = scmp.eq.s32.totalorder %s15, 2
    %p96 = por %p94, %p95
    %p97 = scmp.ne.s32.totalorder %s88, %s89
    %p98 = scmp.eq.s32.totalorder %s15, 0
    %p99 = por %p97, %p98
    %p100 = scmp.ne.s32.totalorder %s88, %s89
    %p101 = scmp.eq.s32.totalorder %s16, 2
    %p102 = por %p100, %p101
    %p104 = scmp.ne.s32.totalorder %s89, %s103
    %p105 = scmp.eq.s32.totalorder %s16, 0
    %p106 = por %p104, %p105
    %s107 = ssub.s32 %s10, %s17
    %p108 = scmp.eq.s32.totalorder %s107, 0
    %s110 = sadd.s32 %s109, 1
    %s111 = scalar_select %p108, %s109, %s110
    %p114 = pneg %p108
    %p115 = scmp.eq.s32.totalorder %s10, 2
    %p116 = por %p114, %p115
    %p117 = scmp.ne.s32.totalorder %s109, %s112
    %p118 = scmp.eq.s32.totalorder %s10, 0
    %p119 = por %p117, %p118
    %p120 = scmp.ne.s32.totalorder %s109, %s112
    %p121 = scmp.eq.s32.totalorder %s15, 2
    %p122 = por %p120, %p121
    %p123 = scmp.ne.s32.totalorder %s112, %s113
    %p124 = scmp.eq.s32.totalorder %s15, 0
    %p125 = por %p123, %p124
    %p126 = scmp.ne.s32.totalorder %s112, %s113
    %p127 = scmp.eq.s32.totalorder %s16, 2
    %p128 = por %p126, %p127
    %p130 = scmp.ne.s32.totalorder %s113, %s129
    %p131 = scmp.eq.s32.totalorder %s16, 0
    %p132 = por %p130, %p131
    %p133 = scmp.le.s32.totalorder 1, %s10
    %p134 = scmp.lt.s32.totalorder %s10, 4
    %p135 = pnand %p133, %p134
    %p136 = pneg %p135
    // Predicated region
    $region9: #{_gmodel_forward_padded.5} parent=5 // pred_check
      _
    $region10: #{_gmodel_forward_padded.5} parent=5 // pred_check_branch
      %138 = sbr.rel (%p135) target = $region12
    $region11: #{_gmodel_forward_padded.5} parent=5 // pred_region
      %s139 = ssub.s32 %s10, 1
      // Predicated region
      $region13: #{_gmodel_forward_padded.5} parent=11 // pred_check
        %p140 = pneg %p57
      $region14: #{_gmodel_forward_padded.5} parent=11 // pred_check_branch
        %142 = sbr.rel (%p140) target = $region16
      $region15: #{_gmodel_forward_padded.5} parent=11 // pred_region
        _
      $region16: #{_gmodel_forward_padded.5} parent=11 // pred_fallthru
        _
      // Predicated region
      $region17: #{_gmodel_forward_padded.5} parent=11 // pred_check
        %p143 = pneg %p78
      $region18: #{_gmodel_forward_padded.5} parent=11 // pred_check_branch
        %145 = sbr.rel (%p143) target = $region20
      $region19: #{_gmodel_forward_padded.5} parent=11 // pred_region
        _
      $region20: #{_gmodel_forward_padded.5} parent=11 // pred_fallthru
        _
      // Predicated region
      $region21: #{_gmodel_forward_padded.5} parent=11 // pred_check
        %p146 = pneg %p99
      $region22: #{_gmodel_forward_padded.5} parent=11 // pred_check_branch
        %148 = sbr.rel (%p146) target = $region24
      $region23: #{_gmodel_forward_padded.5} parent=11 // pred_region
        _
      $region24: #{_gmodel_forward_padded.5} parent=11 // pred_fallthru
        _
    $region12: #{_gmodel_forward_padded.5} parent=5 // pred_fallthru
      _
    %p149 = scmp.lt.s32.totalorder %s10, 3
    // Predicated region
    $region25: #{_gmodel_forward_padded.5} parent=5 // pred_check
      %p150 = pneg %p149
    $region26: #{_gmodel_forward_padded.5} parent=5 // pred_check_branch
      %152 = sbr.rel (%p150) target = $region28
    $region27: #{_gmodel_forward_padded.5} parent=5 // pred_region
      // Predicated region
      $region29: #{_gmodel_forward_padded.5} parent=27 // pred_check
        %p153 = pneg %p30
      $region30: #{_gmodel_forward_padded.5} parent=27 // pred_check_branch
        %155 = sbr.rel (%p153) target = $region32
      $region31: #{_gmodel_forward_padded.5} parent=27 // pred_region
        %s156 = smul.u32 2, %s10
        %p157 = scmp.lt.s32.totalorder %s156, 5
        %s158 = scalar_select %p157, %s156, 5
        %s159 = smul.addr %s158, 4
        %s160 = scalar_lea.vmem %s0, %s159
        %s161 = smul.u32 2, %s10
      $region32: #{_gmodel_forward_padded.5} parent=27 // pred_fallthru
        _
    $region28: #{_gmodel_forward_padded.5} parent=5 // pred_fallthru
      _
    %p162 = scmp.le.s32.totalorder 1, %s10
    %p163 = scmp.lt.s32.totalorder %s10, 4
    %p164 = pnand %p162, %p163
    %p165 = pneg %p164
    // Predicated region
    $region33: #{_gmodel_forward_padded.5} parent=5 // pred_check
      _
    $region34: #{_gmodel_forward_padded.5} parent=5 // pred_check_branch
      %167 = sbr.rel (%p164) target = $region36
    $region35: #{_gmodel_forward_padded.5} parent=5 // pred_region
      %s168 = ssub.s32 %s10, 1
      %s169 = smul.u32 2, %s15
      %p170 = scmp.lt.s32.totalorder %s169, 5
      %s171 = scalar_select %p170, %s169, 5
      %s172 = smul.addr %s171, 4
      %s173 = scalar_lea.vmem %s0, %s172
      %p174 = pneg %p36
      %p175 = pneg %p33
      %p176 = pneg %p57
      %p177 = pneg %p54
      %p178 = pneg %p78
      %p179 = pneg %p75
      %p180 = pneg %p99
      %p181 = pneg %p96
      %p182 = pneg %p125
      %p183 = pneg %p122
      %s184 = smul.u32 2, %s15
      %p185 = scmp.lt.s32.totalorder %s184, 5
      %s186 = scalar_select %p185, %s184, 5
      %s187 = smul.addr %s186, 8
      %s188 = scalar_lea.vmem %s4, %s187
      %s189 = smul.u32 2, %s15
      %p190 = scmp.lt.s32.totalorder %s189, 5
      %s191 = scalar_select %p190, %s189, 5
      %s192 = smul.addr %s191, 4
      %s193 = scalar_lea.vmem %s0, %s192
      %s194 = smul.u32 2, %s15
      %s195 = smul.u32 2, %s15
      %p196 = scmp.lt.s32.totalorder %s195, 5
      %s197 = scalar_select %p196, %s195, 5
      %s198 = smul.addr %s197, 8
      %s199 = scalar_lea.vmem %s4, %s198
      %s200 = smul.u32 2, %s15
      %v202 = vld [vmem:[%s193] sm:$0xf]
      %v203 = vld [vmem:[%s193 + $0x4] sm:$0xf]
      %v204 = vld [vmem:[%s1] sm:$0xf]
      %v205 = vld [vmem:[%s1 + $0x4] sm:$0xf]
      %v206 = vld [vmem:[%s1 + $0x8] sm:$0xf]
      %v207 = vld [vmem:[%s1 + $0xc] sm:$0xf]
      %v208 = vld [vmem:[%s1 + $0x10] sm:$0xf]
      %v209 = vld [vmem:[%s1 + $0x14] sm:$0xf]
      %v210 = vld [vmem:[%s1 + $0x18] sm:$0xf]
      %v211 = vld [vmem:[%s1 + $0x1c] sm:$0xf]
      %v212 = vld [vmem:[%s1 + $0x20] sm:$0xf]
      %v213 = vld [vmem:[%s1 + $0x24] sm:$0xf]
      %v214 = vld [vmem:[%s1 + $0x28] sm:$0xf]
      %v215 = vld [vmem:[%s1 + $0x2c] sm:$0xf]
      %v216 = vld [vmem:[%s1 + $0x30] sm:$0xf]
      %v217 = vld [vmem:[%s1 + $0x34] sm:$0xf]
      %v218 = vld [vmem:[%s1 + $0x38] sm:$0xf]
      %v219 = vld [vmem:[%s1 + $0x3c] sm:$0xf]
      %v222 = vunpack.c.l.b16 %v202
      %v223 = vunpack.c.l.b16 %v203
      %v224 = vpack.c.b16 %v223, %v222
      %v242 = vunpack.c.l.b16 %v204
      %v243 = vunpack.c.l.b16 %v205
      %v244 = vunpack.c.l.b16 %v206
      %v245 = vunpack.c.l.b16 %v207
      %v246 = vunpack.c.l.b16 %v208
      %v247 = vunpack.c.l.b16 %v209
      %v248 = vunpack.c.l.b16 %v210
      %v249 = vunpack.c.l.b16 %v211
      %v250 = vunpack.c.l.b16 %v212
      %v251 = vunpack.c.l.b16 %v213
      %v252 = vunpack.c.l.b16 %v214
      %v253 = vunpack.c.l.b16 %v215
      %v254 = vunpack.c.l.b16 %v216
      %v255 = vunpack.c.l.b16 %v217
      %v256 = vunpack.c.l.b16 %v218
      %v257 = vunpack.c.l.b16 %v219
      %v258 = vpack.c.b16 %v243, %v242
      %v259 = vpack.c.b16 %v245, %v244
      %v260 = vpack.c.b16 %v247, %v246
      %v261 = vpack.c.b16 %v249, %v248
      %v262 = vpack.c.b16 %v251, %v250
      %v263 = vpack.c.b16 %v253, %v252
      %v264 = vpack.c.b16 %v255, %v254
      %v265 = vpack.c.b16 %v257, %v256
      %274 = vmatprep.subr.bf16.mxu0 0
      %275 = vmatpush1.bf16.msra.mxu0 %v258
      %276 = vmatprep.subr.bf16.mxu0 0
      %277 = vmatpush1.bf16.msra.mxu0 %v259
      %278 = vmatprep.subr.bf16.mxu0 0
      %279 = vmatpush1.bf16.msra.mxu0 %v260
      %280 = vmatprep.subr.bf16.mxu0 0
      %281 = vmatpush1.bf16.msra.mxu0 %v261
      %282 = vmatprep.subr.bf16.mxu0 0
      %283 = vmatpush1.bf16.msra.mxu0 %v262
      %284 = vmatprep.subr.bf16.mxu0 0
      %285 = vmatpush1.bf16.msra.mxu0 %v263
      %286 = vmatprep.subr.bf16.mxu0 0
      %287 = vmatpush1.bf16.msra.mxu0 %v264
      %288 = vmatprep.subr.bf16.mxu0 0
      %289 = vmatpush1.bf16.msra.mxu0 %v265
      %290 = vmatprep.subr.bf16.mxu0 0
      %291 = vmatpush1.bf16.msra.mxu0 0
      %292 = vmatprep.subr.bf16.mxu0 0
      %293 = vmatpush1.bf16.msra.mxu0 0
      %294 = vmatprep.subr.bf16.mxu0 0
      %295 = vmatpush1.bf16.msra.mxu0 0
      %296 = vmatprep.subr.bf16.mxu0 0
      %297 = vmatpush1.bf16.msra.mxu0 0
      %298 = vmatprep.subr.bf16.mxu0 0
      %299 = vmatpush1.bf16.msra.mxu0 0
      %300 = vmatprep.subr.bf16.mxu0 0
      %301 = vmatpush1.bf16.msra.mxu0 0
      %302 = vmatprep.subr.bf16.mxu0 0
      %303 = vmatpush1.bf16.msra.mxu0 0
      %304 = vmatprep.subr.bf16.mxu0 0
      %305 = vmatpush1.bf16.msra.mxu0 0
      %306 = vmatprep.mubr.bf16.mxu0 0
      %307 = vmatmul.mubr.bf16.gmra.mrb[0].mxu0 %v224
      %v308 = vpop.f32.mrb[0].mxu0
      %v309 = vadd.f32 0.0, %v308
      %v310 = vpop.f32.mrb[0].mxu0
      %v311 = vpop.f32.mrb[0].mxu0
      %v312 = vadd.f32 0.0, %v311
      %v313 = vpop.f32.mrb[0].mxu0
      %314 = vdwg.mxu0
      %v315 = vmax.f32 %v309, 0.0
      %v316 = vmax.f32 %v312, 0.0
      %v317 = vpack.c.bf16 %v316, %v315
      %v318 = vld [vmem:[%s2] sm:$0xf]
      %v319 = vld [vmem:[%s2 + $0x4] sm:$0xf]
      %v320 = vld [vmem:[%s2 + $0x8] sm:$0xf]
      %v321 = vld [vmem:[%s2 + $0xc] sm:$0xf]
      %v322 = vld [vmem:[%s2 + $0x10] sm:$0xf]
      %v323 = vld [vmem:[%s2 + $0x14] sm:$0xf]
      %v324 = vld [vmem:[%s2 + $0x18] sm:$0xf]
      %v325 = vld [vmem:[%s2 + $0x1c] sm:$0xf]
      %v326 = vld [vmem:[%s2 + $0x20] sm:$0xf]
      %v327 = vld [vmem:[%s2 + $0x24] sm:$0xf]
      %v328 = vld [vmem:[%s2 + $0x28] sm:$0xf]
      %v329 = vld [vmem:[%s2 + $0x2c] sm:$0xf]
      %v330 = vld [vmem:[%s2 + $0x30] sm:$0xf]
      %v331 = vld [vmem:[%s2 + $0x34] sm:$0xf]
      %v332 = vld [vmem:[%s2 + $0x38] sm:$0xf]
      %v333 = vld [vmem:[%s2 + $0x3c] sm:$0xf]
      %v350 = vunpack.c.l.b16 %v318
      %v351 = vunpack.c.l.b16 %v319
      %v352 = vunpack.c.l.b16 %v320
      %v353 = vunpack.c.l.b16 %v321
      %v354 = vunpack.c.l.b16 %v322
      %v355 = vunpack.c.l.b16 %v323
      %v356 = vunpack.c.l.b16 %v324
      %v357 = vunpack.c.l.b16 %v325
      %v358 = vunpack.c.l.b16 %v326
      %v359 = vunpack.c.l.b16 %v327
      %v360 = vunpack.c.l.b16 %v328
      %v361 = vunpack.c.l.b16 %v329
      %v362 = vunpack.c.l.b16 %v330
      %v363 = vunpack.c.l.b16 %v331
      %v364 = vunpack.c.l.b16 %v332
      %v365 = vunpack.c.l.b16 %v333
      %v366 = vpack.c.b16 %v351, %v350
      %v367 = vpack.c.b16 %v353, %v352
      %v368 = vpack.c.b16 %v355, %v354
      %v369 = vpack.c.b16 %v357, %v356
      %v370 = vpack.c.b16 %v359, %v358
      %v371 = vpack.c.b16 %v361, %v360
      %v372 = vpack.c.b16 %v363, %v362
      %v373 = vpack.c.b16 %v365, %v364
      %382 = vmatprep.subr.bf16.mxu0 0
      %383 = vmatpush1.bf16.msra.mxu0 %v366
      %384 = vmatprep.subr.bf16.mxu0 0
      %385 = vmatpush1.bf16.msra.mxu0 %v367
      %386 = vmatprep.subr.bf16.mxu0 0
      %387 = vmatpush1.bf16.msra.mxu0 %v368
      %388 = vmatprep.subr.bf16.mxu0 0
      %389 = vmatpush1.bf16.msra.mxu0 %v369
      %390 = vmatprep.subr.bf16.mxu0 0
      %391 = vmatpush1.bf16.msra.mxu0 %v370
      %392 = vmatprep.subr.bf16.mxu0 0
      %393 = vmatpush1.bf16.msra.mxu0 %v371
      %394 = vmatprep.subr.bf16.mxu0 0
      %395 = vmatpush1.bf16.msra.mxu0 %v372
      %396 = vmatprep.subr.bf16.mxu0 0
      %397 = vmatpush1.bf16.msra.mxu0 %v373
      %398 = vmatprep.subr.bf16.mxu0 0
      %399 = vmatpush1.bf16.msra.mxu0 0
      %400 = vmatprep.subr.bf16.mxu0 0
      %401 = vmatpush1.bf16.msra.mxu0 0
      %402 = vmatprep.subr.bf16.mxu0 0
      %403 = vmatpush1.bf16.msra.mxu0 0
      %404 = vmatprep.subr.bf16.mxu0 0
      %405 = vmatpush1.bf16.msra.mxu0 0
      %406 = vmatprep.subr.bf16.mxu0 0
      %407 = vmatpush1.bf16.msra.mxu0 0
      %408 = vmatprep.subr.bf16.mxu0 0
      %409 = vmatpush1.bf16.msra.mxu0 0
      %410 = vmatprep.subr.bf16.mxu0 0
      %411 = vmatpush1.bf16.msra.mxu0 0
      %412 = vmatprep.subr.bf16.mxu0 0
      %413 = vmatpush1.bf16.msra.mxu0 0
      %414 = vmatprep.mubr.bf16.mxu0 0
      %415 = vmatmul.mubr.bf16.gmra.mrb[0].mxu0 %v317
      %v416 = vpop.f32.mrb[0].mxu0
      %v417 = vadd.f32 0.0, %v416
      %v418 = vpop.f32.mrb[0].mxu0
      %v419 = vpop.f32.mrb[0].mxu0
      %v420 = vadd.f32 0.0, %v419
      %v421 = vpop.f32.mrb[0].mxu0
      %422 = vdwg.mxu0
      %423 = vadd.xlane.f32.xlu0 %v417
      %v424 = vpop.xlane.xlu0 %423
      %425 = vadd.xlane.f32.xlu0 %v420
      %v426 = vpop.xlane.xlu0 %425
      %v427 = vmul.f32 %v424, 0.0625
      %v428 = vmul.f32 %v426, 0.0625
      %v429 = vsub.f32 %v417, %v427
      %v430 = vsub.f32 %v420, %v428
      %v431 = vlaneseq
      %v432 = vand.u32 %v431, 127
      %vm433 = vcmp.lt.s32.totalorder %v432, 16
      %v434 = vsel %vm433, 1, 0
      %v435 = vcvt.s32.f32 %v434
      %v436 = vmul.f32 %v429, %v435
      %v437 = vmul.f32 %v430, %v435
      %v438 = vmul.f32 %v436, %v436
      %v439 = vmul.f32 %v437, %v437
      %440 = vadd.xlane.f32.xlu0 %v438
      %v441 = vpop.xlane.xlu0 %440
      %442 = vadd.xlane.f32.xlu0 %v439
      %v443 = vpop.xlane.xlu0 %442
      %v444 = vpack.c.bf16 %v437, %v436
      %v445 = vld [vmem:[%s3] sm:$0xf]
      %v446 = vld [vmem:[%s3 + $0x4] sm:$0xf]
      %v447 = vld [vmem:[%s3 + $0x8] sm:$0xf]
      %v448 = vld [vmem:[%s3 + $0xc] sm:$0xf]
      %v449 = vld [vmem:[%s3 + $0x10] sm:$0xf]
      %v450 = vld [vmem:[%s3 + $0x14] sm:$0xf]
      %v451 = vld [vmem:[%s3 + $0x18] sm:$0xf]
      %v452 = vld [vmem:[%s3 + $0x1c] sm:$0xf]
      %v453 = vld [vmem:[%s3 + $0x20] sm:$0xf]
      %v454 = vld [vmem:[%s3 + $0x24] sm:$0xf]
      %v455 = vld [vmem:[%s3 + $0x28] sm:$0xf]
      %v456 = vld [vmem:[%s3 + $0x2c] sm:$0xf]
      %v457 = vld [vmem:[%s3 + $0x30] sm:$0xf]
      %v458 = vld [vmem:[%s3 + $0x34] sm:$0xf]
      %v459 = vld [vmem:[%s3 + $0x38] sm:$0xf]
      %v460 = vld [vmem:[%s3 + $0x3c] sm:$0xf]
      %v477 = vunpack.c.l.b16 %v445
      %v478 = vunpack.c.l.b16 %v446
      %v479 = vunpack.c.l.b16 %v447
      %v480 = vunpack.c.l.b16 %v448
      %v481 = vunpack.c.l.b16 %v449
      %v482 = vunpack.c.l.b16 %v450
      %v483 = vunpack.c.l.b16 %v451
      %v484 = vunpack.c.l.b16 %v452
      %v485 = vunpack.c.l.b16 %v453
      %v486 = vunpack.c.l.b16 %v454
      %v487 = vunpack.c.l.b16 %v455
      %v488 = vunpack.c.l.b16 %v456
      %v489 = vunpack.c.l.b16 %v457
      %v490 = vunpack.c.l.b16 %v458
      %v491 = vunpack.c.l.b16 %v459
      %v492 = vunpack.c.l.b16 %v460
      %v493 = vpack.c.b16 %v478, %v477
      %v494 = vpack.c.b16 %v480, %v479
      %v495 = vpack.c.b16 %v482, %v481
      %v496 = vpack.c.b16 %v484, %v483
      %v497 = vpack.c.b16 %v486, %v485
      %v498 = vpack.c.b16 %v488, %v487
      %v499 = vpack.c.b16 %v490, %v489
      %v500 = vpack.c.b16 %v492, %v491
      %509 = vmatprep.subr.bf16.mxu0 0
      %510 = vmatpush1.bf16.xpose.msra.mxu0 %v493
      %511 = vmatprep.subr.bf16.mxu0 0
      %512 = vmatpush1.bf16.xpose.msra.mxu0 %v494
      %513 = vmatprep.subr.bf16.mxu0 0
      %514 = vmatpush1.bf16.xpose.msra.mxu0 %v495
      %515 = vmatprep.subr.bf16.mxu0 0
      %516 = vmatpush1.bf16.xpose.msra.mxu0 %v496
      %517 = vmatprep.subr.bf16.mxu0 0
      %518 = vmatpush1.bf16.xpose.msra.mxu0 %v497
      %519 = vmatprep.subr.bf16.mxu0 0
      %520 = vmatpush1.bf16.xpose.msra.mxu0 %v498
      %521 = vmatprep.subr.bf16.mxu0 0
      %522 = vmatpush1.bf16.xpose.msra.mxu0 %v499
      %523 = vmatprep.subr.bf16.mxu0 0
      %524 = vmatpush1.bf16.xpose.msra.mxu0 %v500
      %525 = vmatprep.subr.bf16.mxu0 0
      %526 = vmatpush1.bf16.xpose.msra.mxu0 0
      %527 = vmatprep.subr.bf16.mxu0 0
      %528 = vmatpush1.bf16.xpose.msra.mxu0 0
      %529 = vmatprep.subr.bf16.mxu0 0
      %530 = vmatpush1.bf16.xpose.msra.mxu0 0
      %531 = vmatprep.subr.bf16.mxu0 0
      %532 = vmatpush1.bf16.xpose.msra.mxu0 0
      %533 = vmatprep.subr.bf16.mxu0 0
      %534 = vmatpush1.bf16.xpose.msra.mxu0 0
      %535 = vmatprep.subr.bf16.mxu0 0
      %536 = vmatpush1.bf16.xpose.msra.mxu0 0
      %537 = vmatprep.subr.bf16.mxu0 0
      %538 = vmatpush1.bf16.xpose.msra.mxu0 0
      %539 = vmatprep.subr.bf16.mxu0 0
      %540 = vmatpush1.bf16.xpose.msra.mxu0 0
      %541 = vmatprep.mubr.bf16.mxu0 0
      %542 = vmatmul.mubr.bf16.gmra.mrb[0].mxu0 %v444
      %v543 = vpop.f32.mrb[0].mxu0
      %v544 = vadd.f32 0.0, %v543
      %v545 = vpop.f32.mrb[0].mxu0
      %v546 = vpop.f32.mrb[0].mxu0
      %v547 = vadd.f32 0.0, %v546
      %v548 = vpop.f32.mrb[0].mxu0
      %549 = vdwg.mxu0
      %v550 = vadd.f32 %v441, 1e-12
      %v551 = vadd.f32 %v443, 1e-12
      %v552 = vrsqrt.pop %v550
      %v553 = vrsqrt.pop %v551
      %v554 = vmul.f32 %v544, %v552
      %v555 = vmul.f32 %v547, %v553
      %v556 = vmul.f32 %v554, 5.74
      %v557 = vmul.f32 %v555, 5.74
      %v558 = vxor.u32 %v556, 2147483648
      %v559 = vxor.u32 %v557, 2147483648
      %v560 = vmul.f32 %v558, 1.442695
      %v561 = vpow.pop %v560
      %v562 = vmul.f32 %v559, 1.442695
      %v563 = vpow.pop %v562
      %v564 = vadd.f32 %v561, 1.0
      %v565 = vadd.f32 %v563, 1.0
      %v566 = vrcp.pop %v564
      %v567 = vmul.f32 1.0, %v566
      %v568 = vrcp.pop %v565
      %v569 = vmul.f32 1.0, %v568
      %570 = vst [vmem:[%s199] sm:$0xff] %v567
      %571 = vst [vmem:[%s199 + $0x8] sm:$0xff] %v569
      %s572 = smul.u32 2, %s15
      %p573 = scmp.lt.s32.totalorder %s572, 5
      %s574 = scalar_select %p573, %s572, 5
      %s575 = smul.addr %s574, 8
      %s576 = scalar_lea.vmem %s4, %s575
      // Predicated region
      $region37: #{_gmodel_forward_padded.5} parent=35 // pred_check
        %p577 = pneg %p122
      $region38: #{_gmodel_forward_padded.5} parent=35 // pred_check_branch
        %579 = sbr.rel (%p577) target = $region40
      $region39: #{_gmodel_forward_padded.5} parent=35 // pred_region
        %s580 = smul.u32 2, %s15
      $region40: #{_gmodel_forward_padded.5} parent=35 // pred_fallthru
        _
    $region36: #{_gmodel_forward_padded.5} parent=5 // pred_fallthru
      _
    %p581 = scmp.le.s32.totalorder 2, %s10
    // Predicated region
    $region41: #{_gmodel_forward_padded.5} parent=5 // pred_check
      %p582 = pneg %p581
    $region42: #{_gmodel_forward_padded.5} parent=5 // pred_check_branch
      %584 = sbr.rel (%p582) target = $region44
    $region43: #{_gmodel_forward_padded.5} parent=5 // pred_region
      %s585 = ssub.s32 %s10, 2
      // Predicated region
      $region45: #{_gmodel_forward_padded.5} parent=43 // pred_check
        %p586 = pneg %p128
      $region46: #{_gmodel_forward_padded.5} parent=43 // pred_check_branch
        %588 = sbr.rel (%p586) target = $region48
      $region47: #{_gmodel_forward_padded.5} parent=43 // pred_region
        %s589 = smul.u32 2, %s16
        %p590 = scmp.lt.s32.totalorder %s589, 5
        %s591 = scalar_select %p590, %s589, 5
        %s592 = smul.addr %s591, 8
        %s593 = scalar_lea.vmem %s4, %s592
      $region48: #{_gmodel_forward_padded.5} parent=43 // pred_fallthru
        _
    $region44: #{_gmodel_forward_padded.5} parent=5 // pred_fallthru
      _
  $region6: #{_gmodel_forward_padded.5} parent=0 // loop_footer
    %s14 = sadd.s32 1, %s10
  $region7: #{_gmodel_forward_padded.5} parent=0 // loop_footer_branch
    %9 = sbr.rel target = $region3
  $region8: #{_gmodel_forward_padded.5} parent=0 // loop_exit
    _

// kernel: _gmodel_forward_padded.4
$region0: #{_gmodel_forward_padded.4}
  #allocation0 [shape = 'u32[]', space=smem, size = 0x4, offset = 0x4, fixed_abs, tag = 'smem constant byte address 0x4 - core index']
  #allocation1 [shape = 'u32[144,128]{1,0:T(1,128)}', space=vmem, size = 0x12000, scoped, tag = 'internal scratch']
  %s0 = inlined_call_operand.vmem [shape: bf16[128,128], index: 0, kind: input, shape index: {}]
  %s1 = inlined_call_operand.vmem [shape: bf16[128,128], index: 1, kind: input, shape index: {}]
  %s2 = inlined_call_operand.vmem [shape: bf16[128,128], index: 2, kind: input, shape index: {}]
  %s3 = inlined_call_operand.vmem [shape: bf16[128,128], index: 3, kind: output, shape index: {}]
  %s4 = sld [smem:[#allocation0]]
  $region22: #{_gmodel_forward_padded.4} parent=0
    _
  %s6 = ssub.s32 1, %s4
  %s7 = scalar_select 0, %s6, %s4
  // Predicated region
  $region2: #{_gmodel_forward_padded.4} parent=0 // pred_check
    _
  $region3: #{_gmodel_forward_padded.4} parent=0 // pred_check_branch
    %9 = sbr.rel (0) target = $region5
  $region4: #{_gmodel_forward_padded.4} parent=0 // pred_region
    _
  $region5: #{_gmodel_forward_padded.4} parent=0 // pred_fallthru
    _
  // Predicated region
  $region6: #{_gmodel_forward_padded.4} parent=0 // pred_check
    _
  $region7: #{_gmodel_forward_padded.4} parent=0 // pred_check_branch
    %11 = sbr.rel (0) target = $region9
  $region8: #{_gmodel_forward_padded.4} parent=0 // pred_region
    _
  $region9: #{_gmodel_forward_padded.4} parent=0 // pred_fallthru
    _
  // Predicated region
  $region10: #{_gmodel_forward_padded.4} parent=0 // pred_check
    _
  $region11: #{_gmodel_forward_padded.4} parent=0 // pred_check_branch
    %13 = sbr.rel (0) target = $region13
  $region12: #{_gmodel_forward_padded.4} parent=0 // pred_region
    _
  $region13: #{_gmodel_forward_padded.4} parent=0 // pred_fallthru
    _
  %v15 = vld [vmem:[%s0] sm:$0xf]
  %v16 = vld [vmem:[%s0 + $0x4] sm:$0xf]
  %v17 = vld [vmem:[%s0 + $0x8] sm:$0xf]
  %v18 = vld [vmem:[%s0 + $0xc] sm:$0xf]
  %v19 = vld [vmem:[%s0 + $0x10] sm:$0xf]
  %v20 = vld [vmem:[%s0 + $0x14] sm:$0xf]
  %v21 = vld [vmem:[%s0 + $0x18] sm:$0xf]
  %v22 = vld [vmem:[%s0 + $0x1c] sm:$0xf]
  %v23 = vld [vmem:[%s0 + $0x20] sm:$0xf]
  %v24 = vld [vmem:[%s0 + $0x24] sm:$0xf]
  %v25 = vld [vmem:[%s0 + $0x28] sm:$0xf]
  %v26 = vld [vmem:[%s0 + $0x2c] sm:$0xf]
  %v27 = vld [vmem:[%s0 + $0x30] sm:$0xf]
  %v28 = vld [vmem:[%s0 + $0x34] sm:$0xf]
  %v29 = vld [vmem:[%s0 + $0x38] sm:$0xf]
  %v30 = vld [vmem:[%s0 + $0x3c] sm:$0xf]
  %v31 = vld [vmem:[%s1] sm:$0xf]
  %v32 = vld [vmem:[%s1 + $0x4] sm:$0xf]
  %v33 = vld [vmem:[%s1 + $0x8] sm:$0xf]
  %v34 = vld [vmem:[%s1 + $0xc] sm:$0xf]
  %v35 = vld [vmem:[%s1 + $0x10] sm:$0xf]
  %v36 = vld [vmem:[%s1 + $0x14] sm:$0xf]
  %v37 = vld [vmem:[%s1 + $0x18] sm:$0xf]
  %v38 = vld [vmem:[%s1 + $0x1c] sm:$0xf]
  %v39 = vld [vmem:[%s1 + $0x20] sm:$0xf]
  %v40 = vld [vmem:[%s1 + $0x24] sm:$0xf]
  %v41 = vld [vmem:[%s1 + $0x28] sm:$0xf]
  %v42 = vld [vmem:[%s1 + $0x2c] sm:$0xf]
  %v43 = vld [vmem:[%s1 + $0x30] sm:$0xf]
  %v44 = vld [vmem:[%s1 + $0x34] sm:$0xf]
  %v45 = vld [vmem:[%s1 + $0x38] sm:$0xf]
  %v46 = vld [vmem:[%s1 + $0x3c] sm:$0xf]
  %v63 = vunpack.c.l.b16 %v15
  %v64 = vunpack.c.l.b16 %v16
  %v65 = vunpack.c.l.b16 %v17
  %v66 = vunpack.c.l.b16 %v18
  %v67 = vunpack.c.l.b16 %v19
  %v68 = vunpack.c.l.b16 %v20
  %v69 = vunpack.c.l.b16 %v21
  %v70 = vunpack.c.l.b16 %v22
  %v71 = vunpack.c.l.b16 %v23
  %v72 = vunpack.c.l.b16 %v24
  %v73 = vunpack.c.l.b16 %v25
  %v74 = vunpack.c.l.b16 %v26
  %v75 = vunpack.c.l.b16 %v27
  %v76 = vunpack.c.l.b16 %v28
  %v77 = vunpack.c.l.b16 %v29
  %v78 = vunpack.c.l.b16 %v30
  %v79 = vpack.c.b16 %v64, %v63
  %v80 = vpack.c.b16 %v66, %v65
  %v81 = vpack.c.b16 %v68, %v67
  %v82 = vpack.c.b16 %v70, %v69
  %v83 = vpack.c.b16 %v72, %v71
  %v84 = vpack.c.b16 %v74, %v73
  %v85 = vpack.c.b16 %v76, %v75
  %v86 = vpack.c.b16 %v78, %v77
  %v111 = vunpack.c.l.b16 %v31
  %v112 = vunpack.c.l.b16 %v32
  %v113 = vunpack.c.l.b16 %v33
  %v114 = vunpack.c.l.b16 %v34
  %v115 = vunpack.c.l.b16 %v35
  %v116 = vunpack.c.l.b16 %v36
  %v117 = vunpack.c.l.b16 %v37
  %v118 = vunpack.c.l.b16 %v38
  %v119 = vunpack.c.l.b16 %v39
  %v120 = vunpack.c.l.b16 %v40
  %v121 = vunpack.c.l.b16 %v41
  %v122 = vunpack.c.l.b16 %v42
  %v123 = vunpack.c.l.b16 %v43
  %v124 = vunpack.c.l.b16 %v44
  %v125 = vunpack.c.l.b16 %v45
  %v126 = vunpack.c.l.b16 %v46
  %v127 = vpack.c.b16 %v112, %v111
  %v128 = vpack.c.b16 %v114, %v113
  %v129 = vpack.c.b16 %v116, %v115
  %v130 = vpack.c.b16 %v118, %v117
  %v131 = vpack.c.b16 %v120, %v119
  %v132 = vpack.c.b16 %v122, %v121
  %v133 = vpack.c.b16 %v124, %v123
  %v134 = vpack.c.b16 %v126, %v125
  %143 = vmatprep.subr.bf16.mxu0 0
  %144 = vmatpush1.bf16.msra.mxu0 %v127
  %145 = vmatprep.subr.bf16.mxu0 0
  %146 = vmatpush1.bf16.msra.mxu0 %v128
  %147 = vmatprep.subr.bf16.mxu0 0
  %148 = vmatpush1.bf16.msra.mxu0 %v129
  %149 = vmatprep.subr.bf16.mxu0 0
  %150 = vmatpush1.bf16.msra.mxu0 %v130
  %151 = vmatprep.subr.bf16.mxu0 0
  %152 = vmatpush1.bf16.msra.mxu0 %v131
  %153 = vmatprep.subr.bf16.mxu0 0
  %154 = vmatpush1.bf16.msra.mxu0 %v132
  %155 = vmatprep.subr.bf16.mxu0 0
  %156 = vmatpush1.bf16.msra.mxu0 %v133
  %157 = vmatprep.subr.bf16.mxu0 0
  %158 = vmatpush1.bf16.msra.mxu0 %v134
  %159 = vmatprep.subr.bf16.mxu0 0
  %160 = vmatpush1.bf16.msra.mxu0 0
  %161 = vmatprep.subr.bf16.mxu0 0
  %162 = vmatpush1.bf16.msra.mxu0 0
  %163 = vmatprep.subr.bf16.mxu0 0
  %164 = vmatpush1.bf16.msra.mxu0 0
  %165 = vmatprep.subr.bf16.mxu0 0
  %166 = vmatpush1.bf16.msra.mxu0 0
  %167 = vmatprep.subr.bf16.mxu0 0
  %168 = vmatpush1.bf16.msra.mxu0 0
  %169 = vmatprep.subr.bf16.mxu0 0
  %170 = vmatpush1.bf16.msra.mxu0 0
  %171 = vmatprep.subr.bf16.mxu0 0
  %172 = vmatpush1.bf16.msra.mxu0 0
  %173 = vmatprep.subr.bf16.mxu0 0
  %174 = vmatpush1.bf16.msra.mxu0 0
  %175 = vmatprep.mubr.bf16.mxu0 0
  %176 = vmatmul.mubr.bf16.gmra.mrb[0].mxu0 %v79
  %v177 = vpop.f32.mrb[0].mxu0
  %v178 = vadd.f32 0.0, %v177
  %v179 = vpop.f32.mrb[0].mxu0
  %v180 = vpop.f32.mrb[0].mxu0
  %v181 = vadd.f32 0.0, %v180
  %v182 = vpop.f32.mrb[0].mxu0
  %183 = vmatprep.mubr.bf16.mxu0 0
  %184 = vmatmul.mubr.bf16.gmra.mrb[0].mxu0 %v80
  %v185 = vpop.f32.mrb[0].mxu0
  %v186 = vadd.f32 0.0, %v185
  %v187 = vpop.f32.mrb[0].mxu0
  %v188 = vpop.f32.mrb[0].mxu0
  %v189 = vadd.f32 0.0, %v188
  %v190 = vpop.f32.mrb[0].mxu0
  %191 = vmatprep.mubr.bf16.mxu0 0
  %192 = vmatmul.mubr.bf16.gmra.mrb[0].mxu0 %v81
  %v193 = vpop.f32.mrb[0].mxu0
  %v194 = vadd.f32 0.0, %v193
  %v195 = vpop.f32.mrb[0].mxu0
  %v196 = vpop.f32.mrb[0].mxu0
  %v197 = vadd.f32 0.0, %v196
  %v198 = vpop.f32.mrb[0].mxu0
  %199 = vmatprep.mubr.bf16.mxu0 0
  %200 = vmatmul.mubr.bf16.gmra.mrb[0].mxu0 %v82
  %v201 = vpop.f32.mrb[0].mxu0
  %v202 = vadd.f32 0.0, %v201
  %v203 = vpop.f32.mrb[0].mxu0
  %v204 = vpop.f32.mrb[0].mxu0
  %v205 = vadd.f32 0.0, %v204
  %v206 = vpop.f32.mrb[0].mxu0
  %207 = vmatprep.mubr.bf16.mxu0 0
  %208 = vmatmul.mubr.bf16.gmra.mrb[0].mxu0 %v83
  %v209 = vpop.f32.mrb[0].mxu0
  %v210 = vadd.f32 0.0, %v209
  %v211 = vpop.f32.mrb[0].mxu0
  %v212 = vpop.f32.mrb[0].mxu0
  %v213 = vadd.f32 0.0, %v212
  %v214 = vpop.f32.mrb[0].mxu0
  %215 = vmatprep.mubr.bf16.mxu0 0
  %216 = vmatmul.mubr.bf16.gmra.mrb[0].mxu0 %v84
  %v217 = vpop.f32.mrb[0].mxu0
  %v218 = vadd.f32 0.0, %v217
  %v219 = vpop.f32.mrb[0].mxu0
  %v220 = vpop.f32.mrb[0].mxu0
  %v221 = vadd.f32 0.0, %v220
  %v222 = vpop.f32.mrb[0].mxu0
  %223 = vmatprep.mubr.bf16.mxu0 0
  %224 = vmatmul.mubr.bf16.gmra.mrb[0].mxu0 %v85
  %v225 = vpop.f32.mrb[0].mxu0
  %v226 = vadd.f32 0.0, %v225
  %v227 = vpop.f32.mrb[0].mxu0
  %v228 = vpop.f32.mrb[0].mxu0
  %v229 = vadd.f32 0.0, %v228
  %v230 = vpop.f32.mrb[0].mxu0
  %231 = vmatprep.mubr.bf16.mxu0 0
  %232 = vmatmul.mubr.bf16.gmra.mrb[0].mxu0 %v86
  %v233 = vpop.f32.mrb[0].mxu0
  %v234 = vadd.f32 0.0, %v233
  %v235 = vpop.f32.mrb[0].mxu0
  %v236 = vpop.f32.mrb[0].mxu0
  %v237 = vadd.f32 0.0, %v236
  %v238 = vpop.f32.mrb[0].mxu0
  %239 = vdwg.mxu0
  %v240 = vmax.f32 %v178, 0.0
  %v241 = vmax.f32 %v181, 0.0
  %v242 = vmax.f32 %v186, 0.0
  %v243 = vmax.f32 %v189, 0.0
  %v244 = vmax.f32 %v194, 0.0
  %v245 = vmax.f32 %v197, 0.0
  %v246 = vmax.f32 %v202, 0.0
  %v247 = vmax.f32 %v205, 0.0
  %v248 = vmax.f32 %v210, 0.0
  %v249 = vmax.f32 %v213, 0.0
  %v250 = vmax.f32 %v218, 0.0
  %v251 = vmax.f32 %v221, 0.0
  %v252 = vmax.f32 %v226, 0.0
  %v253 = vmax.f32 %v229, 0.0
  %v254 = vmax.f32 %v234, 0.0
  %v255 = vmax.f32 %v237, 0.0
  %v256 = vpack.c.bf16 %v241, %v240
  %v257 = vpack.c.bf16 %v243, %v242
  %v258 = vpack.c.bf16 %v245, %v244
  %v259 = vpack.c.bf16 %v247, %v246
  %v260 = vpack.c.bf16 %v249, %v248
  %v261 = vpack.c.bf16 %v251, %v250
  %v262 = vpack.c.bf16 %v253, %v252
  %v263 = vpack.c.bf16 %v255, %v254
  %v264 = vld [vmem:[%s2] sm:$0xf]
  %v265 = vld [vmem:[%s2 + $0x4] sm:$0xf]
  %v266 = vld [vmem:[%s2 + $0x8] sm:$0xf]
  %v267 = vld [vmem:[%s2 + $0xc] sm:$0xf]
  %v268 = vld [vmem:[%s2 + $0x10] sm:$0xf]
  %v269 = vld [vmem:[%s2 + $0x14] sm:$0xf]
  %v270 = vld [vmem:[%s2 + $0x18] sm:$0xf]
  %v271 = vld [vmem:[%s2 + $0x1c] sm:$0xf]
  %v272 = vld [vmem:[%s2 + $0x20] sm:$0xf]
  %v273 = vld [vmem:[%s2 + $0x24] sm:$0xf]
  %v274 = vld [vmem:[%s2 + $0x28] sm:$0xf]
  %v275 = vld [vmem:[%s2 + $0x2c] sm:$0xf]
  %v276 = vld [vmem:[%s2 + $0x30] sm:$0xf]
  %v277 = vld [vmem:[%s2 + $0x34] sm:$0xf]
  %v278 = vld [vmem:[%s2 + $0x38] sm:$0xf]
  %v279 = vld [vmem:[%s2 + $0x3c] sm:$0xf]
  %v296 = vunpack.c.l.b16 %v264
  %v297 = vunpack.c.l.b16 %v265
  %v298 = vunpack.c.l.b16 %v266
  %v299 = vunpack.c.l.b16 %v267
  %v300 = vunpack.c.l.b16 %v268
  %v301 = vunpack.c.l.b16 %v269
  %v302 = vunpack.c.l.b16 %v270
  %v303 = vunpack.c.l.b16 %v271
  %v304 = vunpack.c.l.b16 %v272
  %v305 = vunpack.c.l.b16 %v273
  %v306 = vunpack.c.l.b16 %v274
  %v307 = vunpack.c.l.b16 %v275
  %v308 = vunpack.c.l.b16 %v276
  %v309 = vunpack.c.l.b16 %v277
  %v310 = vunpack.c.l.b16 %v278
  %v311 = vunpack.c.l.b16 %v279
  %v312 = vpack.c.b16 %v297, %v296
  %v313 = vpack.c.b16 %v299, %v298
  %v314 = vpack.c.b16 %v301, %v300
  %v315 = vpack.c.b16 %v303, %v302
  %v316 = vpack.c.b16 %v305, %v304
  %v317 = vpack.c.b16 %v307, %v306
  %v318 = vpack.c.b16 %v309, %v308
  %v319 = vpack.c.b16 %v311, %v310
  %328 = vmatprep.subr.bf16.mxu0 0
  %329 = vmatpush1.bf16.msra.mxu0 %v312
  %330 = vmatprep.subr.bf16.mxu0 0
  %331 = vmatpush1.bf16.msra.mxu0 %v313
  %332 = vmatprep.subr.bf16.mxu0 0
  %333 = vmatpush1.bf16.msra.mxu0 %v314
  %334 = vmatprep.subr.bf16.mxu0 0
  %335 = vmatpush1.bf16.msra.mxu0 %v315
  %336 = vmatprep.subr.bf16.mxu0 0
  %337 = vmatpush1.bf16.msra.mxu0 %v316
  %338 = vmatprep.subr.bf16.mxu0 0
  %339 = vmatpush1.bf16.msra.mxu0 %v317
  %340 = vmatprep.subr.bf16.mxu0 0
  %341 = vmatpush1.bf16.msra.mxu0 %v318
  %342 = vmatprep.subr.bf16.mxu0 0
  %343 = vmatpush1.bf16.msra.mxu0 %v319
  %344 = vmatprep.subr.bf16.mxu0 0
  %345 = vmatpush1.bf16.msra.mxu0 0
  %346 = vmatprep.subr.bf16.mxu0 0
  %347 = vmatpush1.bf16.msra.mxu0 0
  %348 = vmatprep.subr.bf16.mxu0 0
  %349 = vmatpush1.bf16.msra.mxu0 0
  %350 = vmatprep.subr.bf16.mxu0 0
  %351 = vmatpush1.bf16.msra.mxu0 0
  %352 = vmatprep.subr.bf16.mxu0 0
  %353 = vmatpush1.bf16.msra.mxu0 0
  %354 = vmatprep.subr.bf16.mxu0 0
  %355 = vmatpush1.bf16.msra.mxu0 0
  %356 = vmatprep.subr.bf16.mxu0 0
  %357 = vmatpush1.bf16.msra.mxu0 0
  %358 = vmatprep.subr.bf16.mxu0 0
  %359 = vmatpush1.bf16.msra.mxu0 0
  %360 = vmatprep.mubr.bf16.mxu0 0
  %361 = vmatmul.mubr.bf16.gmra.mrb[0].mxu0 %v256
  %v362 = vpop.f32.mrb[0].mxu0
  %v363 = vadd.f32 0.0, %v362
  %v364 = vpop.f32.mrb[0].mxu0
  %v365 = vpop.f32.mrb[0].mxu0
  %v366 = vadd.f32 0.0, %v365
  %v367 = vpop.f32.mrb[0].mxu0
  %368 = vmatprep.mubr.bf16.mxu0 0
  %369 = vmatmul.mubr.bf16.gmra.mrb[0].mxu0 %v257
  %v370 = vpop.f32.mrb[0].mxu0
  %v371 = vadd.f32 0.0, %v370
  %v372 = vpop.f32.mrb[0].mxu0
  %v373 = vpop.f32.mrb[0].mxu0
  %v374 = vadd.f32 0.0, %v373
  %v375 = vpop.f32.mrb[0].mxu0
  %376 = vmatprep.mubr.bf16.mxu0 0
  %377 = vmatmul.mubr.bf16.gmra.mrb[0].mxu0 %v258
  %v378 = vpop.f32.mrb[0].mxu0
  %v379 = vadd.f32 0.0, %v378
  %v380 = vpop.f32.mrb[0].mxu0
  %v381 = vpop.f32.mrb[0].mxu0
  %v382 = vadd.f32 0.0, %v381
  %v383 = vpop.f32.mrb[0].mxu0
  %384 = vmatprep.mubr.bf16.mxu0 0
  %385 = vmatmul.mubr.bf16.gmra.mrb[0].mxu0 %v259
  %v386 = vpop.f32.mrb[0].mxu0
  %v387 = vadd.f32 0.0, %v386
  %v388 = vpop.f32.mrb[0].mxu0
  %v389 = vpop.f32.mrb[0].mxu0
  %v390 = vadd.f32 0.0, %v389
  %v391 = vpop.f32.mrb[0].mxu0
  %392 = vmatprep.mubr.bf16.mxu0 0
  %393 = vmatmul.mubr.bf16.gmra.mrb[0].mxu0 %v260
  %v394 = vpop.f32.mrb[0].mxu0
  %v395 = vadd.f32 0.0, %v394
  %v396 = vpop.f32.mrb[0].mxu0
  %v397 = vpop.f32.mrb[0].mxu0
  %v398 = vadd.f32 0.0, %v397
  %v399 = vpop.f32.mrb[0].mxu0
  %400 = vmatprep.mubr.bf16.mxu0 0
  %401 = vmatmul.mubr.bf16.gmra.mrb[0].mxu0 %v261
  %v402 = vpop.f32.mrb[0].mxu0
  %v403 = vadd.f32 0.0, %v402
  %v404 = vpop.f32.mrb[0].mxu0
  %v405 = vpop.f32.mrb[0].mxu0
  %v406 = vadd.f32 0.0, %v405
  %v407 = vpop.f32.mrb[0].mxu0
  %408 = vmatprep.mubr.bf16.mxu0 0
  %409 = vmatmul.mubr.bf16.gmra.mrb[0].mxu0 %v262
  %v410 = vpop.f32.mrb[0].mxu0
  %v411 = vadd.f32 0.0, %v410
  %v412 = vpop.f32.mrb[0].mxu0
  %v413 = vpop.f32.mrb[0].mxu0
  %v414 = vadd.f32 0.0, %v413
  %v415 = vpop.f32.mrb[0].mxu0
  %416 = vmatprep.mubr.bf16.mxu0 0
  %417 = vmatmul.mubr.bf16.gmra.mrb[0].mxu0 %v263
  %v418 = vpop.f32.mrb[0].mxu0
  %v419 = vadd.f32 0.0, %v418
  %v420 = vpop.f32.mrb[0].mxu0
  %v421 = vpop.f32.mrb[0].mxu0
  %v422 = vadd.f32 0.0, %v421
  %v423 = vpop.f32.mrb[0].mxu0
  %424 = vdwg.mxu0
  %425 = vadd.xlane.f32.xlu0 %v363
  %v426 = vpop.xlane.xlu0 %425
  %427 = vadd.xlane.f32.xlu0 %v366
  %v428 = vpop.xlane.xlu0 %427
  %429 = vadd.xlane.f32.xlu0 %v371
  %v430 = vpop.xlane.xlu0 %429
  %431 = vadd.xlane.f32.xlu0 %v374
  %v432 = vpop.xlane.xlu0 %431
  %433 = vadd.xlane.f32.xlu0 %v379
  %v434 = vpop.xlane.xlu0 %433
  %435 = vadd.xlane.f32.xlu0 %v382
  %v436 = vpop.xlane.xlu0 %435
  %437 = vadd.xlane.f32.xlu0 %v387
  %v438 = vpop.xlane.xlu0 %437
  %439 = vadd.xlane.f32.xlu0 %v390
  %v440 = vpop.xlane.xlu0 %439
  %441 = vadd.xlane.f32.xlu0 %v395
  %v442 = vpop.xlane.xlu0 %441
  %443 = vadd.xlane.f32.xlu0 %v398
  %v444 = vpop.xlane.xlu0 %443
  %445 = vadd.xlane.f32.xlu0 %v403
  %v446 = vpop.xlane.xlu0 %445
  %447 = vadd.xlane.f32.xlu0 %v406
  %v448 = vpop.xlane.xlu0 %447
  %449 = vadd.xlane.f32.xlu0 %v411
  %v450 = vpop.xlane.xlu0 %449
  %451 = vadd.xlane.f32.xlu0 %v414
  %v452 = vpop.xlane.xlu0 %451
  %453 = vadd.xlane.f32.xlu0 %v419
  %v454 = vpop.xlane.xlu0 %453
  %455 = vadd.xlane.f32.xlu0 %v422
  %v456 = vpop.xlane.xlu0 %455
  %v457 = vmul.f32 %v426, 0.0625
  %v458 = vmul.f32 %v428, 0.0625
  %v459 = vmul.f32 %v430, 0.0625
  %v460 = vmul.f32 %v432, 0.0625
  %v461 = vmul.f32 %v434, 0.0625
  %v462 = vmul.f32 %v436, 0.0625
  %v463 = vmul.f32 %v438, 0.0625
  %v464 = vmul.f32 %v440, 0.0625
  %v465 = vmul.f32 %v442, 0.0625
  %v466 = vmul.f32 %v444, 0.0625
  %v467 = vmul.f32 %v446, 0.0625
  %v468 = vmul.f32 %v448, 0.0625
  %v469 = vmul.f32 %v450, 0.0625
  %v470 = vmul.f32 %v452, 0.0625
  %v471 = vmul.f32 %v454, 0.0625
  %v472 = vmul.f32 %v456, 0.0625
  %v473 = vsub.f32 %v363, %v457
  %v474 = vsub.f32 %v366, %v458
  %v475 = vsub.f32 %v371, %v459
  %v476 = vsub.f32 %v374, %v460
  %v477 = vsub.f32 %v379, %v461
  %v478 = vsub.f32 %v382, %v462
  %v479 = vsub.f32 %v387, %v463
  %v480 = vsub.f32 %v390, %v464
  %v481 = vsub.f32 %v395, %v465
  %v482 = vsub.f32 %v398, %v466
  %v483 = vsub.f32 %v403, %v467
  %v484 = vsub.f32 %v406, %v468
  %v485 = vsub.f32 %v411, %v469
  %v486 = vsub.f32 %v414, %v470
  %v487 = vsub.f32 %v419, %v471
  %v488 = vsub.f32 %v422, %v472
  %v489 = vlaneseq
  %v490 = vand.u32 %v489, 127
  %vm491 = vcmp.lt.s32.totalorder %v490, 16
  %v492 = vsel %vm491, 1, 0
  %v493 = vcvt.s32.f32 %v492
  %v494 = vmul.f32 %v473, %v493
  %v495 = vmul.f32 %v474, %v493
  %v496 = vmul.f32 %v475, %v493
  %v497 = vmul.f32 %v476, %v493
  %v498 = vmul.f32 %v477, %v493
  %v499 = vmul.f32 %v478, %v493
  %v500 = vmul.f32 %v479, %v493
  %v501 = vmul.f32 %v480, %v493
  %v502 = vmul.f32 %v481, %v493
  %v503 = vmul.f32 %v482, %v493
  %v504 = vmul.f32 %v483, %v493
  %v505 = vmul.f32 %v484, %v493
  %v506 = vmul.f32 %v485, %v493
  %v507 = vmul.f32 %v486, %v493
  %v508 = vmul.f32 %v487, %v493
  %v509 = vmul.f32 %v488, %v493
  %v510 = vmul.f32 %v494, %v494
  %v511 = vmul.f32 %v495, %v495
  %v512 = vmul.f32 %v496, %v496
  %v513 = vmul.f32 %v497, %v497
  %v514 = vmul.f32 %v498, %v498
  %v515 = vmul.f32 %v499, %v499
  %v516 = vmul.f32 %v500, %v500
  %v517 = vmul.f32 %v501, %v501
  %v518 = vmul.f32 %v502, %v502
  %v519 = vmul.f32 %v503, %v503
  %v520 = vmul.f32 %v504, %v504
  %v521 = vmul.f32 %v505, %v505
  %v522 = vmul.f32 %v506, %v506
  %v523 = vmul.f32 %v507, %v507
  %v524 = vmul.f32 %v508, %v508
  %v525 = vmul.f32 %v509, %v509
  %526 = vadd.xlane.f32.xlu0 %v510
  %v527 = vpop.xlane.xlu0 %526
  %528 = vadd.xlane.f32.xlu0 %v511
  %v529 = vpop.xlane.xlu0 %528
  %530 = vadd.xlane.f32.xlu0 %v512
  %v531 = vpop.xlane.xlu0 %530
  %532 = vadd.xlane.f32.xlu0 %v513
  %v533 = vpop.xlane.xlu0 %532
  %534 = vadd.xlane.f32.xlu0 %v514
  %v535 = vpop.xlane.xlu0 %534
  %536 = vadd.xlane.f32.xlu0 %v515
  %v537 = vpop.xlane.xlu0 %536
  %538 = vadd.xlane.f32.xlu0 %v516
  %v539 = vpop.xlane.xlu0 %538
  %540 = vadd.xlane.f32.xlu0 %v517
  %v541 = vpop.xlane.xlu0 %540
  %542 = vadd.xlane.f32.xlu0 %v518
  %v543 = vpop.xlane.xlu0 %542
  %544 = vadd.xlane.f32.xlu0 %v519
  %v545 = vpop.xlane.xlu0 %544
  %546 = vadd.xlane.f32.xlu0 %v520
  %v547 = vpop.xlane.xlu0 %546
  %548 = vadd.xlane.f32.xlu0 %v521
  %v549 = vpop.xlane.xlu0 %548
  %550 = vadd.xlane.f32.xlu0 %v522
  %v551 = vpop.xlane.xlu0 %550
  %552 = vadd.xlane.f32.xlu0 %v523
  %v553 = vpop.xlane.xlu0 %552
  %554 = vadd.xlane.f32.xlu0 %v524
  %v555 = vpop.xlane.xlu0 %554
  %556 = vadd.xlane.f32.xlu0 %v525
  %v557 = vpop.xlane.xlu0 %556
  %v558 = vadd.f32 %v527, 1e-12
  %v559 = vadd.f32 %v529, 1e-12
  %v560 = vadd.f32 %v531, 1e-12
  %v561 = vadd.f32 %v533, 1e-12
  %v562 = vadd.f32 %v535, 1e-12
  %v563 = vadd.f32 %v537, 1e-12
  %v564 = vadd.f32 %v539, 1e-12
  %v565 = vadd.f32 %v541, 1e-12
  %v566 = vadd.f32 %v543, 1e-12
  %v567 = vadd.f32 %v545, 1e-12
  %v568 = vadd.f32 %v547, 1e-12
  %v569 = vadd.f32 %v549, 1e-12
  %v570 = vadd.f32 %v551, 1e-12
  %v571 = vadd.f32 %v553, 1e-12
  %v572 = vadd.f32 %v555, 1e-12
  %v573 = vadd.f32 %v557, 1e-12
  %v574 = vrsqrt.pop %v558
  %v575 = vrsqrt.pop %v559
  %v576 = vrsqrt.pop %v560
  %v577 = vrsqrt.pop %v561
  %v578 = vrsqrt.pop %v562
  %v579 = vrsqrt.pop %v563
  %v580 = vrsqrt.pop %v564
  %v581 = vrsqrt.pop %v565
  %v582 = vrsqrt.pop %v566
  %v583 = vrsqrt.pop %v567
  %v584 = vrsqrt.pop %v568
  %v585 = vrsqrt.pop %v569
  %v586 = vrsqrt.pop %v570
  %v587 = vrsqrt.pop %v571
  %v588 = vrsqrt.pop %v572
  %v589 = vrsqrt.pop %v573
  %v590 = vmul.f32 %v494, %v574
  %v591 = vmul.f32 %v495, %v575
  %v592 = vmul.f32 %v496, %v576
  %v593 = vmul.f32 %v497, %v577
  %v594 = vmul.f32 %v498, %v578
  %v595 = vmul.f32 %v499, %v579
  %v596 = vmul.f32 %v500, %v580
  %v597 = vmul.f32 %v501, %v581
  %v598 = vmul.f32 %v502, %v582
  %v599 = vmul.f32 %v503, %v583
  %v600 = vmul.f32 %v504, %v584
  %v601 = vmul.f32 %v505, %v585
  %v602 = vmul.f32 %v506, %v586
  %v603 = vmul.f32 %v507, %v587
  %v604 = vmul.f32 %v508, %v588
  %v605 = vmul.f32 %v509, %v589
  %v606 = vpack.c.bf16 %v591, %v590
  %v607 = vpack.c.bf16 %v593, %v592
  %v608 = vpack.c.bf16 %v595, %v594
  %v609 = vpack.c.bf16 %v597, %v596
  %v610 = vpack.c.bf16 %v599, %v598
  %v611 = vpack.c.bf16 %v601, %v600
  %v612 = vpack.c.bf16 %v603, %v602
  %v613 = vpack.c.bf16 %v605, %v604
  %v622 = vunpack.c.l.b16 %v606
  %v623 = vunpack.c.h.b16 %v606
  %v624 = vunpack.c.l.b16 %v607
  %v625 = vunpack.c.h.b16 %v607
  %v626 = vunpack.c.l.b16 %v608
  %v627 = vunpack.c.h.b16 %v608
  %v628 = vunpack.c.l.b16 %v609
  %v629 = vunpack.c.h.b16 %v609
  %v630 = vunpack.c.l.b16 %v610
  %v631 = vunpack.c.h.b16 %v610
  %v632 = vunpack.c.l.b16 %v611
  %v633 = vunpack.c.h.b16 %v611
  %v634 = vunpack.c.l.b16 %v612
  %v635 = vunpack.c.h.b16 %v612
  %v636 = vunpack.c.l.b16 %v613
  %v637 = vunpack.c.h.b16 %v613
  %v638 = vpack.c.b16 %v622, %v622
  %v639 = vpack.c.b16 %v623, %v623
  %v640 = vpack.c.b16 %v624, %v624
  %v641 = vpack.c.b16 %v625, %v625
  %v642 = vpack.c.b16 %v626, %v626
  %v643 = vpack.c.b16 %v627, %v627
  %v644 = vpack.c.b16 %v628, %v628
  %v645 = vpack.c.b16 %v629, %v629
  %v646 = vpack.c.b16 %v630, %v630
  %v647 = vpack.c.b16 %v631, %v631
  %v648 = vpack.c.b16 %v632, %v632
  %v649 = vpack.c.b16 %v633, %v633
  %v650 = vpack.c.b16 %v634, %v634
  %v651 = vpack.c.b16 %v635, %v635
  %v652 = vpack.c.b16 %v636, %v636
  %v653 = vpack.c.b16 %v637, %v637
  %670 = vst [vmem:[%s3] sm:$0xf] %v638
  %671 = vst [vmem:[%s3 + $0x4] sm:$0xf] %v639
  %672 = vst [vmem:[%s3 + $0x8] sm:$0xf] %v640
  %673 = vst [vmem:[%s3 + $0xc] sm:$0xf] %v641
  %674 = vst [vmem:[%s3 + $0x10] sm:$0xf] %v642
  %675 = vst [vmem:[%s3 + $0x14] sm:$0xf] %v643
  %676 = vst [vmem:[%s3 + $0x18] sm:$0xf] %v644
  %677 = vst [vmem:[%s3 + $0x1c] sm:$0xf] %v645
  %678 = vst [vmem:[%s3 + $0x20] sm:$0xf] %v646
  %679 = vst [vmem:[%s3 + $0x24] sm:$0xf] %v647
  %680 = vst [vmem:[%s3 + $0x28] sm:$0xf] %v648
  %681 = vst [vmem:[%s3 + $0x2c] sm:$0xf] %v649
  %682 = vst [vmem:[%s3 + $0x30] sm:$0xf] %v650
  %683 = vst [vmem:[%s3 + $0x34] sm:$0xf] %v651
  %684 = vst [vmem:[%s3 + $0x38] sm:$0xf] %v652
  %685 = vst [vmem:[%s3 + $0x3c] sm:$0xf] %v653
  // Predicated region
  $region14: #{_gmodel_forward_padded.4} parent=0 // pred_check
    _
  $region15: #{_gmodel_forward_padded.4} parent=0 // pred_check_branch
    %687 = sbr.rel (0) target = $region17
  $region16: #{_gmodel_forward_padded.4} parent=0 // pred_region
    _
  $region17: #{_gmodel_forward_padded.4} parent=0 // pred_fallthru
    _
  // Predicated region
  $region18: #{_gmodel_forward_padded.4} parent=0 // pred_check
    _
  $region19: #{_gmodel_forward_padded.4} parent=0 // pred_check_branch
    %689 = sbr.rel (0) target = $region21
  $region20: #{_gmodel_forward_padded.4} parent=0 // pred_region
    _
  $region21: #{_gmodel_forward_padded.4} parent=0 // pred_fallthru
    _

</llo_original>
